<compile_context>
chip_gen: v7x
topology: tpu7x:2x2x1
jax: 0.10.0
libtpu: 0.0.40
codegen_flags: <defaults>
</compile_context>

<pallas_src>
import jax
import jax.numpy as jnp
from jax.experimental import pallas as pl
from jax.experimental.pallas import tpu as pltpu

NUM_LABELS = 3
OUT_PAD = 128  # lane-dense padded logits width (kernel writes 128 lanes, wrapper slices to 3)


def _round_up(x, m):
    return ((x + m - 1) // m) * m


def mlp_kernel(p_ref, h_ref, w1_ref, b1_ref, w2_ref, b2_ref, w3_ref, b3_ref, o_ref):
    bf = jnp.bfloat16

    # Inputs arrive as bf16; do the elementwise feature math in f32 (v5e has no bf16 VPU).
    p = p_ref[...].astype(jnp.float32)
    h = h_ref[...].astype(jnp.float32)
    d = jnp.abs(p - h)
    m = p * h

    # Layer 1 as a single K=4E matmul: lane-concat the feature block (cheap XLU/VPU work,
    # those slots have slack here) so the MXU contraction dimension is fully utilized.
    feats = jnp.concatenate([p, h, d, m], axis=-1).astype(bf)          # (tb, 4E)
    x = jnp.dot(feats, w1_ref[...], preferred_element_type=jnp.float32) + b1_ref[...]
    x = jnp.maximum(x, 0.0)

    # Layer 2: (tb, H1) @ (H1, H2) + b2, ReLU
    x = jnp.dot(x.astype(bf), w2_ref[...], preferred_element_type=jnp.float32) + b2_ref[...]
    x = jnp.maximum(x, 0.0)

    # Layer 3: (tb, H2) @ (H2, OUT_PAD) + b3  (real logits live in the first NUM_LABELS lanes)
    x = jnp.dot(x.astype(bf), w3_ref[...], preferred_element_type=jnp.float32) + b3_ref[...]

    o_ref[...] = x.astype(o_ref.dtype)


def mlp_forward(p, h, params, *, tile_b=512):
    """Fused MLP forward, tiled over the batch axis."""
    w1, b1, w2, b2, w3, b3 = params
    B, E = p.shape
    K1, H1 = w1.shape
    H2 = w2.shape[1]
    assert K1 == 4 * E, (K1, E)

    # Batch tile: large (default 512) to amortize the ~0.35us per-grid-step overhead;
    # always a multiple of 16 (bf16 sublane packing).  If the whole batch fits in one
    # tile, halve the tile so the "parallel" grid axis has >=2 steps and can be sharded
    # across both TensorCores on v7x (harmless extra step on single-TC v5e/v6e).
    tb = min(tile_b, _round_up(B, 16))
    if _round_up(B, tb) // tb < 2 and tb >= 32:
        tb = _round_up(tb // 2, 16)
    Bp = _round_up(B, tb)

    # Stream inputs as bf16 (halves input HBM read / DMA size); kernel upcasts for the
    # elementwise math and the matmul operands are bf16 anyway.
    p = p.astype(jnp.bfloat16)
    h = h.astype(jnp.bfloat16)
    if Bp != B:
        pad = Bp - B
        p = jnp.pad(p, ((0, pad), (0, 0)))
        h = jnp.pad(h, ((0, pad), (0, 0)))

    grid = (Bp // tb,)

    # VMEM working-set estimate.  Weights/biases have constant index_maps (DMA'd once,
    # VMEM-resident) so they are counted once; the pipelined p/h/out tiles are counted
    # double-buffered.  Only raise the scoped limit when the estimate exceeds the default.
    weight_bytes = (4 * E * H1 + H1 * H2 + H2 * OUT_PAD) * 2           # bf16 weights
    bias_bytes = (H1 + H2 + OUT_PAD) * 4                               # f32 biases
    io_bytes = 2 * tb * (2 * E * 2 + OUT_PAD * 2)                      # bf16 p/h/out, double-buffered
    interm_bytes = tb * (4 * E + H1 + H2 + OUT_PAD) * 4                # f32 intermediates
    vmem_est = weight_bytes + bias_bytes + io_bytes + interm_bytes

    cp_kwargs = dict(dimension_semantics=("parallel",))
    if vmem_est > 24 * 1024 * 1024:
        try:
            vmem_cap = pltpu.get_tpu_info().vmem_capacity_bytes        # 64 MiB/TC on v7x
        except Exception:
            vmem_cap = 64 * 1024 * 1024                                # conservative fallback
        cp_kwargs["vmem_limit_bytes"] = int(min(vmem_est + (8 << 20), vmem_cap - (8 << 20)))

    flops = 2 * Bp * (4 * E * H1 + H1 * H2 + H2 * OUT_PAD)
    bytes_accessed = Bp * 2 * E * 2 + weight_bytes + bias_bytes + Bp * OUT_PAD * 2
    cost = pl.CostEstimate(flops=flops, transcendentals=0, bytes_accessed=bytes_accessed)

    out_padded = pl.pallas_call(
        mlp_kernel,
        out_shape=jax.ShapeDtypeStruct((Bp, OUT_PAD), jnp.bfloat16),
        grid_spec=pltpu.PrefetchScalarGridSpec(
            num_scalar_prefetch=0,
            grid=grid,
            in_specs=[
                pl.BlockSpec((tb, E), lambda i: (i, 0)),               # p (bf16)
                pl.BlockSpec((tb, E), lambda i: (i, 0)),               # h (bf16)
                pl.BlockSpec((4 * E, H1), lambda i: (0, 0)),           # w1 (bf16, fused K=4E)
                pl.BlockSpec((1, H1), lambda i: (0, 0)),               # b1 (f32)
                pl.BlockSpec((H1, H2), lambda i: (0, 0)),              # w2 (bf16)
                pl.BlockSpec((1, H2), lambda i: (0, 0)),               # b2 (f32)
                pl.BlockSpec((H2, OUT_PAD), lambda i: (0, 0)),         # w3 (bf16, zero-padded cols)
                pl.BlockSpec((1, OUT_PAD), lambda i: (0, 0)),          # b3 (f32, zero-padded)
            ],
            out_specs=pl.BlockSpec((tb, OUT_PAD), lambda i: (i, 0)),
        ),
        compiler_params=pltpu.CompilerParams(**cp_kwargs),
        cost_estimate=cost,
    )(p, h, w1, b1, w2, b2, w3, b3)

    # Slice the real logits and restore the module's f32 interface.
    return out_padded[:B, :NUM_LABELS].astype(jnp.float32)


def init_params(key, embed_dim, hidden_dim1=1024, hidden_dim2=256):
    """Init mimicking nn.Linear's U(-1/sqrt(fan_in), 1/sqrt(fan_in)).

    Weights stored as [in, out] (transposed vs. torch) in bf16; biases f32.
    w1 is the full (4E, H1) matrix (row order matches [p, h, |p-h|, p*h]).
    The final layer is zero-padded on the output axis from NUM_LABELS -> OUT_PAD.
    """
    in1 = embed_dim * 4
    k = jax.random.split(key, 6)

    def lin(kw, kb, fan_in, fan_out):
        bound = 1.0 / jnp.sqrt(jnp.float32(fan_in))
        w = jax.random.uniform(kw, (fan_in, fan_out), jnp.float32, -bound, bound)
        b = jax.random.uniform(kb, (1, fan_out), jnp.float32, -bound, bound)
        return w, b

    w1, b1 = lin(k[0], k[1], in1, hidden_dim1)
    w2, b2 = lin(k[2], k[3], hidden_dim1, hidden_dim2)
    w3, b3 = lin(k[4], k[5], hidden_dim2, NUM_LABELS)

    w1 = w1.astype(jnp.bfloat16)
    w2 = w2.astype(jnp.bfloat16)

    w3p = jnp.zeros((hidden_dim2, OUT_PAD), jnp.float32).at[:, :NUM_LABELS].set(w3)
    b3p = jnp.zeros((1, OUT_PAD), jnp.float32).at[:, :NUM_LABELS].set(b3)
    w3p = w3p.astype(jnp.bfloat16)

    return (w1, b1, w2, b2, w3p, b3p)


def mlp_reference_kernel_math(p, h, params):
    """Pure-JAX reference mirroring the kernel's bf16-operand / f32-accumulate / bf16-store math."""
    w1, b1, w2, b2, w3, b3 = params
    bf = jnp.bfloat16
    p32 = p.astype(bf).astype(jnp.float32)
    h32 = h.astype(bf).astype(jnp.float32)
    feats = jnp.concatenate([p32, h32, jnp.abs(p32 - h32), p32 * h32], axis=-1).astype(bf)
    x = jnp.maximum(jnp.dot(feats, w1, preferred_element_type=jnp.float32) + b1, 0.0)
    x = jnp.maximum(jnp.dot(x.astype(bf), w2, preferred_element_type=jnp.float32) + b2, 0.0)
    x = jnp.dot(x.astype(bf), w3, preferred_element_type=jnp.float32) + b3
    return x.astype(bf)[:, :NUM_LABELS].astype(jnp.float32)


def mlp_reference_f32(p, h, params):
    """Pure-f32 reference matching the original PyTorch module semantics (looser check)."""
    w1, b1, w2, b2, w3, b3 = params
    f = jnp.float32
    feats = jnp.concatenate([p, h, jnp.abs(p - h), p * h], axis=-1).astype(f)
    x = jnp.maximum(feats @ w1.astype(f) + b1, 0.0)
    x = jnp.maximum(x @ w2.astype(f) + b2, 0.0)
    x = x @ w3.astype(f) + b3
    return x[:, :NUM_LABELS]


if __name__ == "__main__":
    key = jax.random.PRNGKey(0)
    kp, kh, kparam = jax.random.split(key, 3)

    embed_dim = 32
    params = init_params(kparam, embed_dim)

    # Small batch (padded internally to one 16-row tile).
    batch = 8
    p = jax.random.normal(kp, (batch, embed_dim), jnp.float32)
    h = jax.random.normal(kh, (batch, embed_dim), jnp.float32)
    out = jax.block_until_ready(mlp_forward(p, h, params))
    assert out.shape == (batch, NUM_LABELS), out.shape
    ref = mlp_reference_kernel_math(p, h, params)
    assert jnp.allclose(out, ref, atol=2e-2, rtol=2e-2), "mismatch vs kernel-math reference (small batch)"
    ref32 = mlp_reference_f32(p, h, params)
    assert jnp.allclose(out, ref32, atol=1e-1, rtol=1e-1), "drift vs f32 reference (small batch)"

    # Larger batch: exercises real tiling (tile halves to 256 -> 2 grid steps -> both TCs on v7x).
    batch2 = 512
    p2 = jax.random.normal(jax.random.PRNGKey(1), (batch2, embed_dim), jnp.float32)
    h2 = jax.random.normal(jax.random.PRNGKey(2), (batch2, embed_dim), jnp.float32)
    out2 = jax.block_until_ready(mlp_forward(p2, h2, params))
    assert out2.shape == (batch2, NUM_LABELS), out2.shape
    ref2 = mlp_reference_kernel_math(p2, h2, params)
    assert jnp.allclose(out2, ref2, atol=2e-2, rtol=2e-2), "mismatch vs kernel-math reference (large batch)"

    print("KERNEL_OK")
</pallas_src>

<mosaic_0001>
module attributes {stable_mosaic.version = 11 : i64} {
  func.func @mlp_kernel(%arg0: i32, %arg1: memref<16x32xbf16, #tpu.memory_space<vmem>>, %arg2: memref<16x32xbf16, #tpu.memory_space<vmem>>, %arg3: memref<128x1024xbf16, #tpu.memory_space<vmem>>, %arg4: memref<1x1024xf32, #tpu.memory_space<vmem>>, %arg5: memref<1024x256xbf16, #tpu.memory_space<vmem>>, %arg6: memref<1x256xf32, #tpu.memory_space<vmem>>, %arg7: memref<256x128xbf16, #tpu.memory_space<vmem>>, %arg8: memref<1x128xf32, #tpu.memory_space<vmem>>, %arg9: memref<16x128xbf16, #tpu.memory_space<vmem>>) attributes {dimension_semantics = [#tpu.dimension_semantics<parallel>], iteration_bounds = array<i64: 1>, scalar_prefetch = 0 : i64, scratch_operands = 0 : i64, tpu.core_type = #tpu.core_type<tc>, window_params = [{transform_indices = @transform_0, window_bounds = array<i64: 16, 32>}, {transform_indices = @transform_1, window_bounds = array<i64: 16, 32>}, {pipeline_mode = #tpu.pipeline_mode<synchronous>, transform_indices = @transform_2, window_bounds = array<i64: 128, 1024>}, {pipeline_mode = #tpu.pipeline_mode<synchronous>, transform_indices = @transform_3, window_bounds = array<i64: 1, 1024>}, {pipeline_mode = #tpu.pipeline_mode<synchronous>, transform_indices = @transform_4, window_bounds = array<i64: 1024, 256>}, {pipeline_mode = #tpu.pipeline_mode<synchronous>, transform_indices = @transform_5, window_bounds = array<i64: 1, 256>}, {pipeline_mode = #tpu.pipeline_mode<synchronous>, transform_indices = @transform_6, window_bounds = array<i64: 256, 128>}, {pipeline_mode = #tpu.pipeline_mode<synchronous>, transform_indices = @transform_7, window_bounds = array<i64: 1, 128>}, {transform_indices = @transform_8, window_bounds = array<i64: 16, 128>}]} {
    %c0 = arith.constant 0 : index
    %c0_0 = arith.constant 0 : index
    %0 = vector.load %arg1[%c0, %c0_0] : memref<16x32xbf16, #tpu.memory_space<vmem>>, vector<16x32xbf16>
    %1 = arith.extf %0 : vector<16x32xbf16> to vector<16x32xf32>
    %c0_1 = arith.constant 0 : index
    %c0_2 = arith.constant 0 : index
    %2 = vector.load %arg2[%c0_1, %c0_2] : memref<16x32xbf16, #tpu.memory_space<vmem>>, vector<16x32xbf16>
    %3 = arith.extf %2 : vector<16x32xbf16> to vector<16x32xf32>
    %4 = arith.subf %1, %3 : vector<16x32xf32>
    %5 = math.absf %4 : vector<16x32xf32>
    %6 = arith.mulf %1, %3 : vector<16x32xf32>
    %7 = tpu.concatenate %1, %3, %5, %6 in 1 : vector<16x32xf32>, vector<16x32xf32>, vector<16x32xf32>, vector<16x32xf32> -> vector<16x128xf32>
    %8 = arith.truncf %7 : vector<16x128xf32> to vector<16x128xbf16>
    %c0_3 = arith.constant 0 : index
    %c0_4 = arith.constant 0 : index
    %9 = vector.load %arg3[%c0_3, %c0_4] : memref<128x1024xbf16, #tpu.memory_space<vmem>>, vector<128x1024xbf16>
    %cst = arith.constant dense<0.000000e+00> : vector<16x1024xf32>
    %10 = tpu.matmul %8, %9, %cst {dimension_numbers = #tpu.dot_dimension_numbers<[1], [0], [0], [1], [0, 0, 1, 1], [], []>} : vector<16x128xbf16>, vector<128x1024xbf16>, vector<16x1024xf32> -> vector<16x1024xf32>
    %c0_5 = arith.constant 0 : index
    %c0_6 = arith.constant 0 : index
    %11 = vector.load %arg4[%c0_5, %c0_6] : memref<1x1024xf32, #tpu.memory_space<vmem>>, vector<1x1024xf32>
    %12 = vector.broadcast %11 : vector<1x1024xf32> to vector<16x1024xf32>
    %13 = arith.addf %10, %12 : vector<16x1024xf32>
    %cst_7 = arith.constant 0.000000e+00 : f32
    %14 = vector.broadcast %cst_7 : f32 to vector<16x1024xf32>
    %15 = arith.maximumf %13, %14 : vector<16x1024xf32>
    %16 = arith.truncf %15 : vector<16x1024xf32> to vector<16x1024xbf16>
    %c0_8 = arith.constant 0 : index
    %c0_9 = arith.constant 0 : index
    %17 = vector.load %arg5[%c0_8, %c0_9] : memref<1024x256xbf16, #tpu.memory_space<vmem>>, vector<1024x256xbf16>
    %cst_10 = arith.constant dense<0.000000e+00> : vector<16x256xf32>
    %18 = tpu.matmul %16, %17, %cst_10 {dimension_numbers = #tpu.dot_dimension_numbers<[1], [0], [0], [1], [0, 0, 1, 1], [], []>} : vector<16x1024xbf16>, vector<1024x256xbf16>, vector<16x256xf32> -> vector<16x256xf32>
    %c0_11 = arith.constant 0 : index
    %c0_12 = arith.constant 0 : index
    %19 = vector.load %arg6[%c0_11, %c0_12] : memref<1x256xf32, #tpu.memory_space<vmem>>, vector<1x256xf32>
    %20 = vector.broadcast %19 : vector<1x256xf32> to vector<16x256xf32>
    %21 = arith.addf %18, %20 : vector<16x256xf32>
    %cst_13 = arith.constant 0.000000e+00 : f32
    %22 = vector.broadcast %cst_13 : f32 to vector<16x256xf32>
    %23 = arith.maximumf %21, %22 : vector<16x256xf32>
    %24 = arith.truncf %23 : vector<16x256xf32> to vector<16x256xbf16>
    %c0_14 = arith.constant 0 : index
    %c0_15 = arith.constant 0 : index
    %25 = vector.load %arg7[%c0_14, %c0_15] : memref<256x128xbf16, #tpu.memory_space<vmem>>, vector<256x128xbf16>
    %cst_16 = arith.constant dense<0.000000e+00> : vector<16x128xf32>
    %26 = tpu.matmul %24, %25, %cst_16 {dimension_numbers = #tpu.dot_dimension_numbers<[1], [0], [0], [1], [0, 0, 1, 1], [], []>} : vector<16x256xbf16>, vector<256x128xbf16>, vector<16x128xf32> -> vector<16x128xf32>
    %c0_17 = arith.constant 0 : index
    %c0_18 = arith.constant 0 : index
    %27 = vector.load %arg8[%c0_17, %c0_18] : memref<1x128xf32, #tpu.memory_space<vmem>>, vector<1x128xf32>
    %28 = vector.broadcast %27 : vector<1x128xf32> to vector<16x128xf32>
    %29 = arith.addf %26, %28 : vector<16x128xf32>
    %30 = arith.truncf %29 : vector<16x128xf32> to vector<16x128xbf16>
    %c0_19 = arith.constant 0 : index
    %c0_20 = arith.constant 0 : index
    %31 = vector.load %arg9[%c0_19, %c0_20] : memref<16x128xbf16, #tpu.memory_space<vmem>>, vector<16x128xbf16>
    tpu.vector_store %arg9[%c0_19, %c0_20], %30 {strides = array<i32>} : memref<16x128xbf16, #tpu.memory_space<vmem>>, vector<16x128xbf16>,
    return
  }
  func.func @transform_0(%arg0: i32) -> (i32, i32) {
    %c0_i32 = arith.constant 0 : i32
    %c0_i32_0 = arith.constant 0 : i32
    return %arg0, %c0_i32 : i32, i32
  }
  func.func @transform_1(%arg0: i32) -> (i32, i32) {
    %c0_i32 = arith.constant 0 : i32
    %c0_i32_0 = arith.constant 0 : i32
    return %arg0, %c0_i32 : i32, i32
  }
  func.func @transform_2(%arg0: i32) -> (i32, i32) {
    %c0_i32 = arith.constant 0 : i32
    %c0_i32_0 = arith.constant 0 : i32
    %c0_i32_1 = arith.constant 0 : i32
    return %c0_i32, %c0_i32_0 : i32, i32
  }
  func.func @transform_3(%arg0: i32) -> (i32, i32) {
    %c0_i32 = arith.constant 0 : i32
    %c0_i32_0 = arith.constant 0 : i32
    %c0_i32_1 = arith.constant 0 : i32
    return %c0_i32, %c0_i32_0 : i32, i32
  }
  func.func @transform_4(%arg0: i32) -> (i32, i32) {
    %c0_i32 = arith.constant 0 : i32
    %c0_i32_0 = arith.constant 0 : i32
    %c0_i32_1 = arith.constant 0 : i32
    return %c0_i32, %c0_i32_0 : i32, i32
  }
  func.func @transform_5(%arg0: i32) -> (i32, i32) {
    %c0_i32 = arith.constant 0 : i32
    %c0_i32_0 = arith.constant 0 : i32
    %c0_i32_1 = arith.constant 0 : i32
    return %c0_i32, %c0_i32_0 : i32, i32
  }
  func.func @transform_6(%arg0: i32) -> (i32, i32) {
    %c0_i32 = arith.constant 0 : i32
    %c0_i32_0 = arith.constant 0 : i32
    %c0_i32_1 = arith.constant 0 : i32
    return %c0_i32, %c0_i32_0 : i32, i32
  }
  func.func @transform_7(%arg0: i32) -> (i32, i32) {
    %c0_i32 = arith.constant 0 : i32
    %c0_i32_0 = arith.constant 0 : i32
    %c0_i32_1 = arith.constant 0 : i32
    return %c0_i32, %c0_i32_0 : i32, i32
  }
  func.func @transform_8(%arg0: i32) -> (i32, i32) {
    %c0_i32 = arith.constant 0 : i32
    %c0_i32_0 = arith.constant 0 : i32
    return %arg0, %c0_i32 : i32, i32
  }
}

</mosaic_0001>

<llo_original>
// kernel: tpu_custom_call.1
$region0: #{tpu_custom_call.1}
  #allocation0 [shape = 'u32[]', space=smem, size = 0x4, offset = 0x4, fixed_abs, tag = 'smem constant byte address 0x4 - core index']
  #allocation1 [shape = 'u32[144,128]{1,0:T(1,128)}', space=vmem, size = 0x12000, scoped, tag = 'internal scratch']
  %s0 = inlined_call_operand.hbm [shape: bf16[16,32], index: 0, kind: input, shape index: {}]
  %s1 = inlined_call_operand.hbm [shape: bf16[16,32], index: 1, kind: input, shape index: {}]
  %s2 = inlined_call_operand.hbm [shape: bf16[128,1024], index: 2, kind: input, shape index: {}]
  %s3 = inlined_call_operand.vmem [shape: f32[1,1024], index: 3, kind: input, shape index: {}]
  %s4 = inlined_call_operand.hbm [shape: bf16[1024,256], index: 4, kind: input, shape index: {}]
  %s5 = inlined_call_operand.vmem [shape: f32[1,256], index: 5, kind: input, shape index: {}]
  %s6 = inlined_call_operand.hbm [shape: bf16[256,128], index: 6, kind: input, shape index: {}]
  %s7 = inlined_call_operand.vmem [shape: f32[1,128], index: 7, kind: input, shape index: {}]
  %s8 = inlined_call_operand.hbm [shape: bf16[16,128], index: 8, kind: output, shape index: {}]
  %s9 = sld [smem:[#allocation0]]
  $region62: #{tpu_custom_call.1} parent=0
    _
  %s11 = ssub.s32 1, %s9
  %s12 = scalar_select 0, %s11, %s9
  $region1: #{tpu_custom_call.1} parent=0
    #allocation2 [shape = 'u8[4096]{0}', space=vmem, size = 0x1000, scoped, tag = 'input window, operand 0, single buffered']
    #allocation3 [shape = 's32[1]{0}', space=sflag, size = 0x4, scoped, tag = 'scoped memory for tpu_custom_call.1']
    #allocation4 [shape = 's32[1]{0}', space=sflag, size = 0x4, scoped, tag = 'scoped memory for tpu_custom_call.1']
    #allocation5 [shape = 'u8[4096]{0}', space=vmem, size = 0x1000, scoped, tag = 'input window, operand 1, single buffered']
    #allocation6 [shape = 's32[1]{0}', space=sflag, size = 0x4, scoped, tag = 'scoped memory for tpu_custom_call.1']
    #allocation7 [shape = 'u8[262144]{0}', space=vmem, size = 0x40000, scoped, tag = 'input window, operand 2, single buffered']
    #allocation8 [shape = 'u8[524288]{0}', space=vmem, size = 0x80000, scoped, tag = 'input window, operand 4, single buffered']
    #allocation9 [shape = 's32[1]{0}', space=sflag, size = 0x4, scoped, tag = 'scoped memory for tpu_custom_call.1']
    #allocation10 [shape = 'u8[65536]{0}', space=vmem, size = 0x10000, scoped, tag = 'input window, operand 6, single buffered']
    #allocation11 [shape = 'u8[4096]{0}', space=vmem, size = 0x1000, scoped, tag = 'output window, operand 0, single buffered']
    %13 = vsyncpa [#allocation3], 0
    %14 = vsyncpa [#allocation6], 0
    %15 = vsyncpa [#allocation9], 0
    %16 = vsyncpa [#allocation4], 0
    // Predicated region
    $region2: #{tpu_custom_call.1} parent=1 // pred_check
      _
    $region3: #{tpu_custom_call.1} parent=1 // pred_check_branch
      %18 = sbr.rel (0) target = $region5
    $region4: #{tpu_custom_call.1} parent=1 // pred_region
      %s20 = ssub.s32 128, 128
      %21 = vsyncadd [#allocation3], %s20
      %s22 = sshll.u32 [#allocation2], 4
      %s23 = int_to_ptr.vmem [resolvable:$true] %s22
      %28 = dma.hbm_to_vmem [thread:$0]  %s0, 128, %s23, [#allocation3], 64, 64, 4
    $region5: #{tpu_custom_call.1} parent=1 // pred_fallthru
      _
    // Predicated region
    $region6: #{tpu_custom_call.1} parent=1 // pred_check
      _
    $region7: #{tpu_custom_call.1} parent=1 // pred_check_branch
      %30 = sbr.rel (0) target = $region9
    $region8: #{tpu_custom_call.1} parent=1 // pred_region
      %s32 = ssub.s32 128, 128
      %33 = vsyncadd [#allocation6], %s32
      %s34 = sshll.u32 [#allocation5], 4
      %s35 = int_to_ptr.vmem [resolvable:$true] %s34
      %40 = dma.hbm_to_vmem [thread:$0]  %s1, 128, %s35, [#allocation6], 64, 64, 4
    $region9: #{tpu_custom_call.1} parent=1 // pred_fallthru
      _
    // Predicated region
    $region10: #{tpu_custom_call.1} parent=1 // pred_check
      _
    $region11: #{tpu_custom_call.1} parent=1 // pred_check_branch
      %42 = sbr.rel (0) target = $region13
    $region12: #{tpu_custom_call.1} parent=1 // pred_region
      %s44 = ssub.s32 8192, 8192
      %45 = vsyncadd [#allocation6], %s44
      %s46 = sshll.u32 [#allocation7], 4
      %s47 = int_to_ptr.vmem [resolvable:$true] %s46
      %52 = dma.hbm_to_vmem [thread:$0]  %s2, 8192, %s47, [#allocation6], 512, 512, 32
    $region13: #{tpu_custom_call.1} parent=1 // pred_fallthru
      _
    // Predicated region
    $region14: #{tpu_custom_call.1} parent=1 // pred_check
      _
    $region15: #{tpu_custom_call.1} parent=1 // pred_check_branch
      %54 = sbr.rel (0) target = $region17
    $region16: #{tpu_custom_call.1} parent=1 // pred_region
      _
    $region17: #{tpu_custom_call.1} parent=1 // pred_fallthru
      _
    // Predicated region
    $region18: #{tpu_custom_call.1} parent=1 // pred_check
      _
    $region19: #{tpu_custom_call.1} parent=1 // pred_check_branch
      %56 = sbr.rel (0) target = $region21
    $region20: #{tpu_custom_call.1} parent=1 // pred_region
      %s58 = ssub.s32 16384, 16384
      %59 = vsyncadd [#allocation9], %s58
      %s60 = sshll.u32 [#allocation8], 4
      %s61 = int_to_ptr.vmem [resolvable:$true] %s60
      %66 = dma.hbm_to_vmem [thread:$0]  %s4, 16384, %s61, [#allocation9], 128, 128, 8
    $region21: #{tpu_custom_call.1} parent=1 // pred_fallthru
      _
    // Predicated region
    $region22: #{tpu_custom_call.1} parent=1 // pred_check
      _
    $region23: #{tpu_custom_call.1} parent=1 // pred_check_branch
      %68 = sbr.rel (0) target = $region25
    $region24: #{tpu_custom_call.1} parent=1 // pred_region
      _
    $region25: #{tpu_custom_call.1} parent=1 // pred_fallthru
      _
    // Predicated region
    $region26: #{tpu_custom_call.1} parent=1 // pred_check
      _
    $region27: #{tpu_custom_call.1} parent=1 // pred_check_branch
      %70 = sbr.rel (0) target = $region29
    $region28: #{tpu_custom_call.1} parent=1 // pred_region
      %s72 = ssub.s32 2048, 2048
      %73 = vsyncadd [#allocation9], %s72
      %s74 = sshll.u32 [#allocation10], 4
      %s75 = int_to_ptr.vmem [resolvable:$true] %s74
      %80 = dma.hbm_to_vmem [thread:$0]  %s6, 2048, %s75, [#allocation9], 64, 64, 4
    $region29: #{tpu_custom_call.1} parent=1 // pred_fallthru
      _
    // Predicated region
    $region30: #{tpu_custom_call.1} parent=1 // pred_check
      _
    $region31: #{tpu_custom_call.1} parent=1 // pred_check_branch
      %82 = sbr.rel (0) target = $region33
    $region32: #{tpu_custom_call.1} parent=1 // pred_region
      _
    $region33: #{tpu_custom_call.1} parent=1 // pred_fallthru
      _
    // Predicated region
    $region34: #{tpu_custom_call.1} parent=1 // pred_check
      _
    $region35: #{tpu_custom_call.1} parent=1 // pred_check_branch
      %84 = sbr.rel (0) target = $region37
    $region36: #{tpu_custom_call.1} parent=1 // pred_region
      %85 = dma.done [#allocation3], 128
    $region37: #{tpu_custom_call.1} parent=1 // pred_fallthru
      _
    // Predicated region
    $region38: #{tpu_custom_call.1} parent=1 // pred_check
      _
    $region39: #{tpu_custom_call.1} parent=1 // pred_check_branch
      %87 = sbr.rel (0) target = $region41
    $region40: #{tpu_custom_call.1} parent=1 // pred_region
      %88 = dma.done [#allocation6], 128
    $region41: #{tpu_custom_call.1} parent=1 // pred_fallthru
      _
    // Predicated region
    $region42: #{tpu_custom_call.1} parent=1 // pred_check
      _
    $region43: #{tpu_custom_call.1} parent=1 // pred_check_branch
      %90 = sbr.rel (0) target = $region45
    $region44: #{tpu_custom_call.1} parent=1 // pred_region
      %91 = dma.done [#allocation6], 8192
    $region45: #{tpu_custom_call.1} parent=1 // pred_fallthru
      _
    // Predicated region
    $region46: #{tpu_custom_call.1} parent=1 // pred_check
      _
    $region47: #{tpu_custom_call.1} parent=1 // pred_check_branch
      %93 = sbr.rel (0) target = $region49
    $region48: #{tpu_custom_call.1} parent=1 // pred_region
      %94 = dma.done [#allocation9], 16384
    $region49: #{tpu_custom_call.1} parent=1 // pred_fallthru
      _
    // Predicated region
    $region50: #{tpu_custom_call.1} parent=1 // pred_check
      _
    $region51: #{tpu_custom_call.1} parent=1 // pred_check_branch
      %96 = sbr.rel (0) target = $region53
    $region52: #{tpu_custom_call.1} parent=1 // pred_region
      %97 = dma.done [#allocation9], 2048
    $region53: #{tpu_custom_call.1} parent=1 // pred_fallthru
      _
    %v99 = vld [vmem:[#allocation2] sm:$0xf]
    %v100 = vld [vmem:[#allocation2 + $0x4] sm:$0xf]
    %v101 = vunpack.c.l.bf16 %v99
    %v102 = vunpack.c.l.bf16 %v100
    %v103 = vld [vmem:[#allocation5] sm:$0xf]
    %v104 = vld [vmem:[#allocation5 + $0x4] sm:$0xf]
    %v105 = vunpack.c.l.bf16 %v103
    %v106 = vunpack.c.l.bf16 %v104
    %v107 = vsub.f32 %v101, %v105
    %v108 = vsub.f32 %v102, %v106
    %v109 = vand.u32 2147483647, %v107
    %v110 = vand.u32 2147483647, %v108
    %v111 = vmul.f32 %v101, %v105
    %v112 = vmul.f32 %v102, %v106
    %115 = vrot.lane.b32.xlu0 %v105, 32
    %v116 = vpop.permute.xlu0 %115
    %117 = vrot.lane.b32.xlu0 %v106, 32
    %v118 = vpop.permute.xlu0 %117
    %123 = vrot.lane.b32.xlu0 %v109, 64
    %v124 = vpop.permute.xlu0 %123
    %125 = vrot.lane.b32.xlu0 %v110, 64
    %v126 = vpop.permute.xlu0 %125
    %131 = vrot.lane.b32.xlu0 %v111, 96
    %v132 = vpop.permute.xlu0 %131
    %133 = vrot.lane.b32.xlu0 %v112, 96
    %v134 = vpop.permute.xlu0 %133
    %vm137 = vcmask 261120
    %v138 = vsel %vm137, %v101, %v116
    %v139 = vsel %vm137, %v102, %v118
    %vm140 = vcmask 523264
    %v141 = vsel %vm140, %v138, %v124
    %v142 = vsel %vm140, %v139, %v126
    %vm143 = vcmask 785408
    %v144 = vsel %vm143, %v141, %v132
    %v145 = vsel %vm143, %v142, %v134
    %v146 = vpack.c.bf16 %v145, %v144
    %v147 = vld [vmem:[#allocation7] sm:$0xff]
    %v148 = vld [vmem:[#allocation7 + $0x8] sm:$0xff]
    %v149 = vld [vmem:[#allocation7 + $0x10] sm:$0xff]
    %v150 = vld [vmem:[#allocation7 + $0x18] sm:$0xff]
    %v151 = vld [vmem:[#allocation7 + $0x20] sm:$0xff]
    %v152 = vld [vmem:[#allocation7 + $0x28] sm:$0xff]
    %v153 = vld [vmem:[#allocation7 + $0x30] sm:$0xff]
    %v154 = vld [vmem:[#allocation7 + $0x38] sm:$0xff]
    %v155 = vld [vmem:[#allocation7 + $0x40] sm:$0xff]
    %v156 = vld [vmem:[#allocation7 + $0x48] sm:$0xff]
    %v157 = vld [vmem:[#allocation7 + $0x50] sm:$0xff]
    %v158 = vld [vmem:[#allocation7 + $0x58] sm:$0xff]
    %v159 = vld [vmem:[#allocation7 + $0x60] sm:$0xff]
    %v160 = vld [vmem:[#allocation7 + $0x68] sm:$0xff]
    %v161 = vld [vmem:[#allocation7 + $0x70] sm:$0xff]
    %v162 = vld [vmem:[#allocation7 + $0x78] sm:$0xff]
    %v163 = vld [vmem:[#allocation7 + $0x80] sm:$0xff]
    %v164 = vld [vmem:[#allocation7 + $0x88] sm:$0xff]
    %v165 = vld [vmem:[#allocation7 + $0x90] sm:$0xff]
    %v166 = vld [vmem:[#allocation7 + $0x98] sm:$0xff]
    %v167 = vld [vmem:[#allocation7 + $0xa0] sm:$0xff]
    %v168 = vld [vmem:[#allocation7 + $0xa8] sm:$0xff]
    %v169 = vld [vmem:[#allocation7 + $0xb0] sm:$0xff]
    %v170 = vld [vmem:[#allocation7 + $0xb8] sm:$0xff]
    %v171 = vld [vmem:[#allocation7 + $0xc0] sm:$0xff]
    %v172 = vld [vmem:[#allocation7 + $0xc8] sm:$0xff]
    %v173 = vld [vmem:[#allocation7 + $0xd0] sm:$0xff]
    %v174 = vld [vmem:[#allocation7 + $0xd8] sm:$0xff]
    %v175 = vld [vmem:[#allocation7 + $0xe0] sm:$0xff]
    %v176 = vld [vmem:[#allocation7 + $0xe8] sm:$0xff]
    %v177 = vld [vmem:[#allocation7 + $0xf0] sm:$0xff]
    %v178 = vld [vmem:[#allocation7 + $0xf8] sm:$0xff]
    %v179 = vld [vmem:[#allocation7 + $0x100] sm:$0xff]
    %v180 = vld [vmem:[#allocation7 + $0x108] sm:$0xff]
    %v181 = vld [vmem:[#allocation7 + $0x110] sm:$0xff]
    %v182 = vld [vmem:[#allocation7 + $0x118] sm:$0xff]
    %v183 = vld [vmem:[#allocation7 + $0x120] sm:$0xff]
    %v184 = vld [vmem:[#allocation7 + $0x128] sm:$0xff]
    %v185 = vld [vmem:[#allocation7 + $0x130] sm:$0xff]
    %v186 = vld [vmem:[#allocation7 + $0x138] sm:$0xff]
    %v187 = vld [vmem:[#allocation7 + $0x140] sm:$0xff]
    %v188 = vld [vmem:[#allocation7 + $0x148] sm:$0xff]
    %v189 = vld [vmem:[#allocation7 + $0x150] sm:$0xff]
    %v190 = vld [vmem:[#allocation7 + $0x158] sm:$0xff]
    %v191 = vld [vmem:[#allocation7 + $0x160] sm:$0xff]
    %v192 = vld [vmem:[#allocation7 + $0x168] sm:$0xff]
    %v193 = vld [vmem:[#allocation7 + $0x170] sm:$0xff]
    %v194 = vld [vmem:[#allocation7 + $0x178] sm:$0xff]
    %v195 = vld [vmem:[#allocation7 + $0x180] sm:$0xff]
    %v196 = vld [vmem:[#allocation7 + $0x188] sm:$0xff]
    %v197 = vld [vmem:[#allocation7 + $0x190] sm:$0xff]
    %v198 = vld [vmem:[#allocation7 + $0x198] sm:$0xff]
    %v199 = vld [vmem:[#allocation7 + $0x1a0] sm:$0xff]
    %v200 = vld [vmem:[#allocation7 + $0x1a8] sm:$0xff]
    %v201 = vld [vmem:[#allocation7 + $0x1b0] sm:$0xff]
    %v202 = vld [vmem:[#allocation7 + $0x1b8] sm:$0xff]
    %v203 = vld [vmem:[#allocation7 + $0x1c0] sm:$0xff]
    %v204 = vld [vmem:[#allocation7 + $0x1c8] sm:$0xff]
    %v205 = vld [vmem:[#allocation7 + $0x1d0] sm:$0xff]
    %v206 = vld [vmem:[#allocation7 + $0x1d8] sm:$0xff]
    %v207 = vld [vmem:[#allocation7 + $0x1e0] sm:$0xff]
    %v208 = vld [vmem:[#allocation7 + $0x1e8] sm:$0xff]
    %v209 = vld [vmem:[#allocation7 + $0x1f0] sm:$0xff]
    %v210 = vld [vmem:[#allocation7 + $0x1f8] sm:$0xff]
    %v211 = vld [vmem:[%s3] sm:$0xff]
    %v213 = vlaneseq
    %v214 = vshrl.u32 %v213, 7
    %v215 = vsub.s32 0, %v214
    %v216 = vrot.slane %v211, %v215
    %v217 = vlaneseq
    %v218 = vshrl.u32 %v217, 7
    %v219 = vsub.s32 1, %v218
    %v220 = vrot.slane %v211, %v219
    %v221 = vlaneseq
    %v222 = vshrl.u32 %v221, 7
    %v223 = vsub.s32 2, %v222
    %v224 = vrot.slane %v211, %v223
    %v225 = vlaneseq
    %v226 = vshrl.u32 %v225, 7
    %v227 = vsub.s32 3, %v226
    %v228 = vrot.slane %v211, %v227
    %v229 = vlaneseq
    %v230 = vshrl.u32 %v229, 7
    %v231 = vsub.s32 4, %v230
    %v232 = vrot.slane %v211, %v231
    %v233 = vlaneseq
    %v234 = vshrl.u32 %v233, 7
    %v235 = vsub.s32 5, %v234
    %v236 = vrot.slane %v211, %v235
    %v237 = vlaneseq
    %v238 = vshrl.u32 %v237, 7
    %v239 = vsub.s32 6, %v238
    %v240 = vrot.slane %v211, %v239
    %v241 = vlaneseq
    %v242 = vshrl.u32 %v241, 7
    %v243 = vsub.s32 7, %v242
    %v244 = vrot.slane %v211, %v243
    %v317 = vunpack.c.l.b16 %v147
    %v318 = vunpack.c.h.b16 %v147
    %v319 = vunpack.c.l.b16 %v148
    %v320 = vunpack.c.h.b16 %v148
    %v321 = vunpack.c.l.b16 %v149
    %v322 = vunpack.c.h.b16 %v149
    %v323 = vunpack.c.l.b16 %v150
    %v324 = vunpack.c.h.b16 %v150
    %v325 = vunpack.c.l.b16 %v151
    %v326 = vunpack.c.h.b16 %v151
    %v327 = vunpack.c.l.b16 %v152
    %v328 = vunpack.c.h.b16 %v152
    %v329 = vunpack.c.l.b16 %v153
    %v330 = vunpack.c.h.b16 %v153
    %v331 = vunpack.c.l.b16 %v154
    %v332 = vunpack.c.h.b16 %v154
    %v333 = vunpack.c.l.b16 %v155
    %v334 = vunpack.c.h.b16 %v155
    %v335 = vunpack.c.l.b16 %v156
    %v336 = vunpack.c.h.b16 %v156
    %v337 = vunpack.c.l.b16 %v157
    %v338 = vunpack.c.h.b16 %v157
    %v339 = vunpack.c.l.b16 %v158
    %v340 = vunpack.c.h.b16 %v158
    %v341 = vunpack.c.l.b16 %v159
    %v342 = vunpack.c.h.b16 %v159
    %v343 = vunpack.c.l.b16 %v160
    %v344 = vunpack.c.h.b16 %v160
    %v345 = vunpack.c.l.b16 %v161
    %v346 = vunpack.c.h.b16 %v161
    %v347 = vunpack.c.l.b16 %v162
    %v348 = vunpack.c.h.b16 %v162
    %v349 = vunpack.c.l.b16 %v163
    %v350 = vunpack.c.h.b16 %v163
    %v351 = vunpack.c.l.b16 %v164
    %v352 = vunpack.c.h.b16 %v164
    %v353 = vunpack.c.l.b16 %v165
    %v354 = vunpack.c.h.b16 %v165
    %v355 = vunpack.c.l.b16 %v166
    %v356 = vunpack.c.h.b16 %v166
    %v357 = vunpack.c.l.b16 %v167
    %v358 = vunpack.c.h.b16 %v167
    %v359 = vunpack.c.l.b16 %v168
    %v360 = vunpack.c.h.b16 %v168
    %v361 = vunpack.c.l.b16 %v169
    %v362 = vunpack.c.h.b16 %v169
    %v363 = vunpack.c.l.b16 %v170
    %v364 = vunpack.c.h.b16 %v170
    %v365 = vunpack.c.l.b16 %v171
    %v366 = vunpack.c.h.b16 %v171
    %v367 = vunpack.c.l.b16 %v172
    %v368 = vunpack.c.h.b16 %v172
    %v369 = vunpack.c.l.b16 %v173
    %v370 = vunpack.c.h.b16 %v173
    %v371 = vunpack.c.l.b16 %v174
    %v372 = vunpack.c.h.b16 %v174
    %v373 = vunpack.c.l.b16 %v175
    %v374 = vunpack.c.h.b16 %v175
    %v375 = vunpack.c.l.b16 %v176
    %v376 = vunpack.c.h.b16 %v176
    %v377 = vunpack.c.l.b16 %v177
    %v378 = vunpack.c.h.b16 %v177
    %v379 = vunpack.c.l.b16 %v178
    %v380 = vunpack.c.h.b16 %v178
    %v381 = vunpack.c.l.b16 %v179
    %v382 = vunpack.c.h.b16 %v179
    %v383 = vunpack.c.l.b16 %v180
    %v384 = vunpack.c.h.b16 %v180
    %v385 = vunpack.c.l.b16 %v181
    %v386 = vunpack.c.h.b16 %v181
    %v387 = vunpack.c.l.b16 %v182
    %v388 = vunpack.c.h.b16 %v182
    %v389 = vunpack.c.l.b16 %v183
    %v390 = vunpack.c.h.b16 %v183
    %v391 = vunpack.c.l.b16 %v184
    %v392 = vunpack.c.h.b16 %v184
    %v393 = vunpack.c.l.b16 %v185
    %v394 = vunpack.c.h.b16 %v185
    %v395 = vunpack.c.l.b16 %v186
    %v396 = vunpack.c.h.b16 %v186
    %v397 = vunpack.c.l.b16 %v187
    %v398 = vunpack.c.h.b16 %v187
    %v399 = vunpack.c.l.b16 %v188
    %v400 = vunpack.c.h.b16 %v188
    %v401 = vunpack.c.l.b16 %v189
    %v402 = vunpack.c.h.b16 %v189
    %v403 = vunpack.c.l.b16 %v190
    %v404 = vunpack.c.h.b16 %v190
    %v405 = vunpack.c.l.b16 %v191
    %v406 = vunpack.c.h.b16 %v191
    %v407 = vunpack.c.l.b16 %v192
    %v408 = vunpack.c.h.b16 %v192
    %v409 = vunpack.c.l.b16 %v193
    %v410 = vunpack.c.h.b16 %v193
    %v411 = vunpack.c.l.b16 %v194
    %v412 = vunpack.c.h.b16 %v194
    %v413 = vunpack.c.l.b16 %v195
    %v414 = vunpack.c.h.b16 %v195
    %v415 = vunpack.c.l.b16 %v196
    %v416 = vunpack.c.h.b16 %v196
    %v417 = vunpack.c.l.b16 %v197
    %v418 = vunpack.c.h.b16 %v197
    %v419 = vunpack.c.l.b16 %v198
    %v420 = vunpack.c.h.b16 %v198
    %v421 = vunpack.c.l.b16 %v199
    %v422 = vunpack.c.h.b16 %v199
    %v423 = vunpack.c.l.b16 %v200
    %v424 = vunpack.c.h.b16 %v200
    %v425 = vunpack.c.l.b16 %v201
    %v426 = vunpack.c.h.b16 %v201
    %v427 = vunpack.c.l.b16 %v202
    %v428 = vunpack.c.h.b16 %v202
    %v429 = vunpack.c.l.b16 %v203
    %v430 = vunpack.c.h.b16 %v203
    %v431 = vunpack.c.l.b16 %v204
    %v432 = vunpack.c.h.b16 %v204
    %v433 = vunpack.c.l.b16 %v205
    %v434 = vunpack.c.h.b16 %v205
    %v435 = vunpack.c.l.b16 %v206
    %v436 = vunpack.c.h.b16 %v206
    %v437 = vunpack.c.l.b16 %v207
    %v438 = vunpack.c.h.b16 %v207
    %v439 = vunpack.c.l.b16 %v208
    %v440 = vunpack.c.h.b16 %v208
    %v441 = vunpack.c.l.b16 %v209
    %v442 = vunpack.c.h.b16 %v209
    %v443 = vunpack.c.l.b16 %v210
    %v444 = vunpack.c.h.b16 %v210
    %v445 = vpack.c.b16 %v325, %v317
    %v446 = vpack.c.b16 %v326, %v318
    %v447 = vpack.c.b16 %v327, %v319
    %v448 = vpack.c.b16 %v328, %v320
    %v449 = vpack.c.b16 %v329, %v321
    %v450 = vpack.c.b16 %v330, %v322
    %v451 = vpack.c.b16 %v331, %v323
    %v452 = vpack.c.b16 %v332, %v324
    %v453 = vpack.c.b16 %v341, %v333
    %v454 = vpack.c.b16 %v342, %v334
    %v455 = vpack.c.b16 %v343, %v335
    %v456 = vpack.c.b16 %v344, %v336
    %v457 = vpack.c.b16 %v345, %v337
    %v458 = vpack.c.b16 %v346, %v338
    %v459 = vpack.c.b16 %v347, %v339
    %v460 = vpack.c.b16 %v348, %v340
    %v461 = vpack.c.b16 %v357, %v349
    %v462 = vpack.c.b16 %v358, %v350
    %v463 = vpack.c.b16 %v359, %v351
    %v464 = vpack.c.b16 %v360, %v352
    %v465 = vpack.c.b16 %v361, %v353
    %v466 = vpack.c.b16 %v362, %v354
    %v467 = vpack.c.b16 %v363, %v355
    %v468 = vpack.c.b16 %v364, %v356
    %v469 = vpack.c.b16 %v373, %v365
    %v470 = vpack.c.b16 %v374, %v366
    %v471 = vpack.c.b16 %v375, %v367
    %v472 = vpack.c.b16 %v376, %v368
    %v473 = vpack.c.b16 %v377, %v369
    %v474 = vpack.c.b16 %v378, %v370
    %v475 = vpack.c.b16 %v379, %v371
    %v476 = vpack.c.b16 %v380, %v372
    %v477 = vpack.c.b16 %v389, %v381
    %v478 = vpack.c.b16 %v390, %v382
    %v479 = vpack.c.b16 %v391, %v383
    %v480 = vpack.c.b16 %v392, %v384
    %v481 = vpack.c.b16 %v393, %v385
    %v482 = vpack.c.b16 %v394, %v386
    %v483 = vpack.c.b16 %v395, %v387
    %v484 = vpack.c.b16 %v396, %v388
    %v485 = vpack.c.b16 %v405, %v397
    %v486 = vpack.c.b16 %v406, %v398
    %v487 = vpack.c.b16 %v407, %v399
    %v488 = vpack.c.b16 %v408, %v400
    %v489 = vpack.c.b16 %v409, %v401
    %v490 = vpack.c.b16 %v410, %v402
    %v491 = vpack.c.b16 %v411, %v403
    %v492 = vpack.c.b16 %v412, %v404
    %v493 = vpack.c.b16 %v421, %v413
    %v494 = vpack.c.b16 %v422, %v414
    %v495 = vpack.c.b16 %v423, %v415
    %v496 = vpack.c.b16 %v424, %v416
    %v497 = vpack.c.b16 %v425, %v417
    %v498 = vpack.c.b16 %v426, %v418
    %v499 = vpack.c.b16 %v427, %v419
    %v500 = vpack.c.b16 %v428, %v420
    %v501 = vpack.c.b16 %v437, %v429
    %v502 = vpack.c.b16 %v438, %v430
    %v503 = vpack.c.b16 %v439, %v431
    %v504 = vpack.c.b16 %v440, %v432
    %v505 = vpack.c.b16 %v441, %v433
    %v506 = vpack.c.b16 %v442, %v434
    %v507 = vpack.c.b16 %v443, %v435
    %v508 = vpack.c.b16 %v444, %v436
    %573 = vmatprep.subr.bf16.mxu0 %v446
    %574 = vmatpush1.bf16.msra.mxu0 %v445
    %575 = vmatprep.subr.bf16.mxu0 %v454
    %576 = vmatpush1.bf16.msra.mxu0 %v453
    %577 = vmatprep.subr.bf16.mxu0 %v462
    %578 = vmatpush1.bf16.msra.mxu0 %v461
    %579 = vmatprep.subr.bf16.mxu0 %v470
    %580 = vmatpush1.bf16.msra.mxu0 %v469
    %581 = vmatprep.subr.bf16.mxu0 %v478
    %582 = vmatpush1.bf16.msra.mxu0 %v477
    %583 = vmatprep.subr.bf16.mxu0 %v486
    %584 = vmatpush1.bf16.msra.mxu0 %v485
    %585 = vmatprep.subr.bf16.mxu0 %v494
    %586 = vmatpush1.bf16.msra.mxu0 %v493
    %587 = vmatprep.subr.bf16.mxu0 %v502
    %588 = vmatpush1.bf16.msra.mxu0 %v501
    %589 = vmatprep.subr.bf16.mxu0 0
    %590 = vmatpush1.bf16.msra.mxu0 0
    %591 = vmatprep.subr.bf16.mxu0 0
    %592 = vmatpush1.bf16.msra.mxu0 0
    %593 = vmatprep.subr.bf16.mxu0 0
    %594 = vmatpush1.bf16.msra.mxu0 0
    %595 = vmatprep.subr.bf16.mxu0 0
    %596 = vmatpush1.bf16.msra.mxu0 0
    %597 = vmatprep.subr.bf16.mxu0 0
    %598 = vmatpush1.bf16.msra.mxu0 0
    %599 = vmatprep.subr.bf16.mxu0 0
    %600 = vmatpush1.bf16.msra.mxu0 0
    %601 = vmatprep.subr.bf16.mxu0 0
    %602 = vmatpush1.bf16.msra.mxu0 0
    %603 = vmatprep.subr.bf16.mxu0 0
    %604 = vmatpush1.bf16.msra.mxu0 0
    %605 = vmatprep.mubr.bf16.mxu0 0
    %606 = vmatmul.mubr.bf16.gmra.mrb[0].mxu0 %v146
    %v607 = vpop.f32.mrb[0].mxu0
    %v608 = vadd.f32 %v216, %v607
    %v609 = vpop.f32.mrb[0].mxu0
    %v610 = vadd.f32 %v220, %v609
    %v611 = vpop.f32.mrb[0].mxu0
    %v612 = vadd.f32 %v216, %v611
    %v613 = vpop.f32.mrb[0].mxu0
    %v614 = vadd.f32 %v220, %v613
    %615 = vdwg.mxu0
    %616 = vmatprep.subr.bf16.mxu0 %v448
    %617 = vmatpush1.bf16.msra.mxu0 %v447
    %618 = vmatprep.subr.bf16.mxu0 %v456
    %619 = vmatpush1.bf16.msra.mxu0 %v455
    %620 = vmatprep.subr.bf16.mxu0 %v464
    %621 = vmatpush1.bf16.msra.mxu0 %v463
    %622 = vmatprep.subr.bf16.mxu0 %v472
    %623 = vmatpush1.bf16.msra.mxu0 %v471
    %624 = vmatprep.subr.bf16.mxu0 %v480
    %625 = vmatpush1.bf16.msra.mxu0 %v479
    %626 = vmatprep.subr.bf16.mxu0 %v488
    %627 = vmatpush1.bf16.msra.mxu0 %v487
    %628 = vmatprep.subr.bf16.mxu0 %v496
    %629 = vmatpush1.bf16.msra.mxu0 %v495
    %630 = vmatprep.subr.bf16.mxu0 %v504
    %631 = vmatpush1.bf16.msra.mxu0 %v503
    %632 = vmatprep.subr.bf16.mxu0 0
    %633 = vmatpush1.bf16.msra.mxu0 0
    %634 = vmatprep.subr.bf16.mxu0 0
    %635 = vmatpush1.bf16.msra.mxu0 0
    %636 = vmatprep.subr.bf16.mxu0 0
    %637 = vmatpush1.bf16.msra.mxu0 0
    %638 = vmatprep.subr.bf16.mxu0 0
    %639 = vmatpush1.bf16.msra.mxu0 0
    %640 = vmatprep.subr.bf16.mxu0 0
    %641 = vmatpush1.bf16.msra.mxu0 0
    %642 = vmatprep.subr.bf16.mxu0 0
    %643 = vmatpush1.bf16.msra.mxu0 0
    %644 = vmatprep.subr.bf16.mxu0 0
    %645 = vmatpush1.bf16.msra.mxu0 0
    %646 = vmatprep.subr.bf16.mxu0 0
    %647 = vmatpush1.bf16.msra.mxu0 0
    %648 = vmatprep.mubr.bf16.mxu0 0
    %649 = vmatmul.mubr.bf16.gmra.mrb[0].mxu0 %v146
    %v650 = vpop.f32.mrb[0].mxu0
    %v651 = vadd.f32 %v224, %v650
    %v652 = vpop.f32.mrb[0].mxu0
    %v653 = vadd.f32 %v228, %v652
    %v654 = vpop.f32.mrb[0].mxu0
    %v655 = vadd.f32 %v224, %v654
    %v656 = vpop.f32.mrb[0].mxu0
    %v657 = vadd.f32 %v228, %v656
    %658 = vdwg.mxu0
    %659 = vmatprep.subr.bf16.mxu0 %v450
    %660 = vmatpush1.bf16.msra.mxu0 %v449
    %661 = vmatprep.subr.bf16.mxu0 %v458
    %662 = vmatpush1.bf16.msra.mxu0 %v457
    %663 = vmatprep.subr.bf16.mxu0 %v466
    %664 = vmatpush1.bf16.msra.mxu0 %v465
    %665 = vmatprep.subr.bf16.mxu0 %v474
    %666 = vmatpush1.bf16.msra.mxu0 %v473
    %667 = vmatprep.subr.bf16.mxu0 %v482
    %668 = vmatpush1.bf16.msra.mxu0 %v481
    %669 = vmatprep.subr.bf16.mxu0 %v490
    %670 = vmatpush1.bf16.msra.mxu0 %v489
    %671 = vmatprep.subr.bf16.mxu0 %v498
    %672 = vmatpush1.bf16.msra.mxu0 %v497
    %673 = vmatprep.subr.bf16.mxu0 %v506
    %674 = vmatpush1.bf16.msra.mxu0 %v505
    %675 = vmatprep.subr.bf16.mxu0 0
    %676 = vmatpush1.bf16.msra.mxu0 0
    %677 = vmatprep.subr.bf16.mxu0 0
    %678 = vmatpush1.bf16.msra.mxu0 0
    %679 = vmatprep.subr.bf16.mxu0 0
    %680 = vmatpush1.bf16.msra.mxu0 0
    %681 = vmatprep.subr.bf16.mxu0 0
    %682 = vmatpush1.bf16.msra.mxu0 0
    %683 = vmatprep.subr.bf16.mxu0 0
    %684 = vmatpush1.bf16.msra.mxu0 0
    %685 = vmatprep.subr.bf16.mxu0 0
    %686 = vmatpush1.bf16.msra.mxu0 0
    %687 = vmatprep.subr.bf16.mxu0 0
    %688 = vmatpush1.bf16.msra.mxu0 0
    %689 = vmatprep.subr.bf16.mxu0 0
    %690 = vmatpush1.bf16.msra.mxu0 0
    %691 = vmatprep.mubr.bf16.mxu0 0
    %692 = vmatmul.mubr.bf16.gmra.mrb[0].mxu0 %v146
    %v693 = vpop.f32.mrb[0].mxu0
    %v694 = vadd.f32 %v232, %v693
    %v695 = vpop.f32.mrb[0].mxu0
    %v696 = vadd.f32 %v236, %v695
    %v697 = vpop.f32.mrb[0].mxu0
    %v698 = vadd.f32 %v232, %v697
    %v699 = vpop.f32.mrb[0].mxu0
    %v700 = vadd.f32 %v236, %v699
    %701 = vdwg.mxu0
    %702 = vmatprep.subr.bf16.mxu0 %v452
    %703 = vmatpush1.bf16.msra.mxu0 %v451
    %704 = vmatprep.subr.bf16.mxu0 %v460
    %705 = vmatpush1.bf16.msra.mxu0 %v459
    %706 = vmatprep.subr.bf16.mxu0 %v468
    %707 = vmatpush1.bf16.msra.mxu0 %v467
    %708 = vmatprep.subr.bf16.mxu0 %v476
    %709 = vmatpush1.bf16.msra.mxu0 %v475
    %710 = vmatprep.subr.bf16.mxu0 %v484
    %711 = vmatpush1.bf16.msra.mxu0 %v483
    %712 = vmatprep.subr.bf16.mxu0 %v492
    %713 = vmatpush1.bf16.msra.mxu0 %v491
    %714 = vmatprep.subr.bf16.mxu0 %v500
    %715 = vmatpush1.bf16.msra.mxu0 %v499
    %716 = vmatprep.subr.bf16.mxu0 %v508
    %717 = vmatpush1.bf16.msra.mxu0 %v507
    %718 = vmatprep.subr.bf16.mxu0 0
    %719 = vmatpush1.bf16.msra.mxu0 0
    %720 = vmatprep.subr.bf16.mxu0 0
    %721 = vmatpush1.bf16.msra.mxu0 0
    %722 = vmatprep.subr.bf16.mxu0 0
    %723 = vmatpush1.bf16.msra.mxu0 0
    %724 = vmatprep.subr.bf16.mxu0 0
    %725 = vmatpush1.bf16.msra.mxu0 0
    %726 = vmatprep.subr.bf16.mxu0 0
    %727 = vmatpush1.bf16.msra.mxu0 0
    %728 = vmatprep.subr.bf16.mxu0 0
    %729 = vmatpush1.bf16.msra.mxu0 0
    %730 = vmatprep.subr.bf16.mxu0 0
    %731 = vmatpush1.bf16.msra.mxu0 0
    %732 = vmatprep.subr.bf16.mxu0 0
    %733 = vmatpush1.bf16.msra.mxu0 0
    %734 = vmatprep.mubr.bf16.mxu0 0
    %735 = vmatmul.mubr.bf16.gmra.mrb[0].mxu0 %v146
    %v736 = vpop.f32.mrb[0].mxu0
    %v737 = vadd.f32 %v240, %v736
    %v738 = vpop.f32.mrb[0].mxu0
    %v739 = vadd.f32 %v244, %v738
    %v740 = vpop.f32.mrb[0].mxu0
    %v741 = vadd.f32 %v240, %v740
    %v742 = vpop.f32.mrb[0].mxu0
    %v743 = vadd.f32 %v244, %v742
    %744 = vdwg.mxu0
    %v745 = vmax.f32 %v608, 0.0
    %v746 = vmax.f32 %v610, 0.0
    %v747 = vmax.f32 %v651, 0.0
    %v748 = vmax.f32 %v653, 0.0
    %v749 = vmax.f32 %v694, 0.0
    %v750 = vmax.f32 %v696, 0.0
    %v751 = vmax.f32 %v737, 0.0
    %v752 = vmax.f32 %v739, 0.0
    %v753 = vmax.f32 %v612, 0.0
    %v754 = vmax.f32 %v614, 0.0
    %v755 = vmax.f32 %v655, 0.0
    %v756 = vmax.f32 %v657, 0.0
    %v757 = vmax.f32 %v698, 0.0
    %v758 = vmax.f32 %v700, 0.0
    %v759 = vmax.f32 %v741, 0.0
    %v760 = vmax.f32 %v743, 0.0
    %v761 = vpack.c.bf16 %v753, %v745
    %v762 = vpack.c.bf16 %v754, %v746
    %v763 = vpack.c.bf16 %v755, %v747
    %v764 = vpack.c.bf16 %v756, %v748
    %v765 = vpack.c.bf16 %v757, %v749
    %v766 = vpack.c.bf16 %v758, %v750
    %v767 = vpack.c.bf16 %v759, %v751
    %v768 = vpack.c.bf16 %v760, %v752
    %v769 = vld [vmem:[#allocation8] sm:$0xff]
    %v770 = vld [vmem:[#allocation8 + $0x8] sm:$0xff]
    %v771 = vld [vmem:[#allocation8 + $0x10] sm:$0xff]
    %v772 = vld [vmem:[#allocation8 + $0x18] sm:$0xff]
    %v773 = vld [vmem:[#allocation8 + $0x20] sm:$0xff]
    %v774 = vld [vmem:[#allocation8 + $0x28] sm:$0xff]
    %v775 = vld [vmem:[#allocation8 + $0x30] sm:$0xff]
    %v776 = vld [vmem:[#allocation8 + $0x38] sm:$0xff]
    %v777 = vld [vmem:[#allocation8 + $0x40] sm:$0xff]
    %v778 = vld [vmem:[#allocation8 + $0x48] sm:$0xff]
    %v779 = vld [vmem:[#allocation8 + $0x50] sm:$0xff]
    %v780 = vld [vmem:[#allocation8 + $0x58] sm:$0xff]
    %v781 = vld [vmem:[#allocation8 + $0x60] sm:$0xff]
    %v782 = vld [vmem:[#allocation8 + $0x68] sm:$0xff]
    %v783 = vld [vmem:[#allocation8 + $0x70] sm:$0xff]
    %v784 = vld [vmem:[#allocation8 + $0x78] sm:$0xff]
    %v785 = vld [vmem:[#allocation8 + $0x80] sm:$0xff]
    %v786 = vld [vmem:[#allocation8 + $0x88] sm:$0xff]
    %v787 = vld [vmem:[#allocation8 + $0x90] sm:$0xff]
    %v788 = vld [vmem:[#allocation8 + $0x98] sm:$0xff]
    %v789 = vld [vmem:[#allocation8 + $0xa0] sm:$0xff]
    %v790 = vld [vmem:[#allocation8 + $0xa8] sm:$0xff]
    %v791 = vld [vmem:[#allocation8 + $0xb0] sm:$0xff]
    %v792 = vld [vmem:[#allocation8 + $0xb8] sm:$0xff]
    %v793 = vld [vmem:[#allocation8 + $0xc0] sm:$0xff]
    %v794 = vld [vmem:[#allocation8 + $0xc8] sm:$0xff]
    %v795 = vld [vmem:[#allocation8 + $0xd0] sm:$0xff]
    %v796 = vld [vmem:[#allocation8 + $0xd8] sm:$0xff]
    %v797 = vld [vmem:[#allocation8 + $0xe0] sm:$0xff]
    %v798 = vld [vmem:[#allocation8 + $0xe8] sm:$0xff]
    %v799 = vld [vmem:[#allocation8 + $0xf0] sm:$0xff]
    %v800 = vld [vmem:[#allocation8 + $0xf8] sm:$0xff]
    %v801 = vld [vmem:[#allocation8 + $0x100] sm:$0xff]
    %v802 = vld [vmem:[#allocation8 + $0x108] sm:$0xff]
    %v803 = vld [vmem:[#allocation8 + $0x110] sm:$0xff]
    %v804 = vld [vmem:[#allocation8 + $0x118] sm:$0xff]
    %v805 = vld [vmem:[#allocation8 + $0x120] sm:$0xff]
    %v806 = vld [vmem:[#allocation8 + $0x128] sm:$0xff]
    %v807 = vld [vmem:[#allocation8 + $0x130] sm:$0xff]
    %v808 = vld [vmem:[#allocation8 + $0x138] sm:$0xff]
    %v809 = vld [vmem:[#allocation8 + $0x140] sm:$0xff]
    %v810 = vld [vmem:[#allocation8 + $0x148] sm:$0xff]
    %v811 = vld [vmem:[#allocation8 + $0x150] sm:$0xff]
    %v812 = vld [vmem:[#allocation8 + $0x158] sm:$0xff]
    %v813 = vld [vmem:[#allocation8 + $0x160] sm:$0xff]
    %v814 = vld [vmem:[#allocation8 + $0x168] sm:$0xff]
    %v815 = vld [vmem:[#allocation8 + $0x170] sm:$0xff]
    %v816 = vld [vmem:[#allocation8 + $0x178] sm:$0xff]
    %v817 = vld [vmem:[#allocation8 + $0x180] sm:$0xff]
    %v818 = vld [vmem:[#allocation8 + $0x188] sm:$0xff]
    %v819 = vld [vmem:[#allocation8 + $0x190] sm:$0xff]
    %v820 = vld [vmem:[#allocation8 + $0x198] sm:$0xff]
    %v821 = vld [vmem:[#allocation8 + $0x1a0] sm:$0xff]
    %v822 = vld [vmem:[#allocation8 + $0x1a8] sm:$0xff]
    %v823 = vld [vmem:[#allocation8 + $0x1b0] sm:$0xff]
    %v824 = vld [vmem:[#allocation8 + $0x1b8] sm:$0xff]
    %v825 = vld [vmem:[#allocation8 + $0x1c0] sm:$0xff]
    %v826 = vld [vmem:[#allocation8 + $0x1c8] sm:$0xff]
    %v827 = vld [vmem:[#allocation8 + $0x1d0] sm:$0xff]
    %v828 = vld [vmem:[#allocation8 + $0x1d8] sm:$0xff]
    %v829 = vld [vmem:[#allocation8 + $0x1e0] sm:$0xff]
    %v830 = vld [vmem:[#allocation8 + $0x1e8] sm:$0xff]
    %v831 = vld [vmem:[#allocation8 + $0x1f0] sm:$0xff]
    %v832 = vld [vmem:[#allocation8 + $0x1f8] sm:$0xff]
    %v833 = vld [vmem:[#allocation8 + $0x200] sm:$0xff]
    %v834 = vld [vmem:[#allocation8 + $0x208] sm:$0xff]
    %v835 = vld [vmem:[#allocation8 + $0x210] sm:$0xff]
    %v836 = vld [vmem:[#allocation8 + $0x218] sm:$0xff]
    %v837 = vld [vmem:[#allocation8 + $0x220] sm:$0xff]
    %v838 = vld [vmem:[#allocation8 + $0x228] sm:$0xff]
    %v839 = vld [vmem:[#allocation8 + $0x230] sm:$0xff]
    %v840 = vld [vmem:[#allocation8 + $0x238] sm:$0xff]
    %v841 = vld [vmem:[#allocation8 + $0x240] sm:$0xff]
    %v842 = vld [vmem:[#allocation8 + $0x248] sm:$0xff]
    %v843 = vld [vmem:[#allocation8 + $0x250] sm:$0xff]
    %v844 = vld [vmem:[#allocation8 + $0x258] sm:$0xff]
    %v845 = vld [vmem:[#allocation8 + $0x260] sm:$0xff]
    %v846 = vld [vmem:[#allocation8 + $0x268] sm:$0xff]
    %v847 = vld [vmem:[#allocation8 + $0x270] sm:$0xff]
    %v848 = vld [vmem:[#allocation8 + $0x278] sm:$0xff]
    %v849 = vld [vmem:[#allocation8 + $0x280] sm:$0xff]
    %v850 = vld [vmem:[#allocation8 + $0x288] sm:$0xff]
    %v851 = vld [vmem:[#allocation8 + $0x290] sm:$0xff]
    %v852 = vld [vmem:[#allocation8 + $0x298] sm:$0xff]
    %v853 = vld [vmem:[#allocation8 + $0x2a0] sm:$0xff]
    %v854 = vld [vmem:[#allocation8 + $0x2a8] sm:$0xff]
    %v855 = vld [vmem:[#allocation8 + $0x2b0] sm:$0xff]
    %v856 = vld [vmem:[#allocation8 + $0x2b8] sm:$0xff]
    %v857 = vld [vmem:[#allocation8 + $0x2c0] sm:$0xff]
    %v858 = vld [vmem:[#allocation8 + $0x2c8] sm:$0xff]
    %v859 = vld [vmem:[#allocation8 + $0x2d0] sm:$0xff]
    %v860 = vld [vmem:[#allocation8 + $0x2d8] sm:$0xff]
    %v861 = vld [vmem:[#allocation8 + $0x2e0] sm:$0xff]
    %v862 = vld [vmem:[#allocation8 + $0x2e8] sm:$0xff]
    %v863 = vld [vmem:[#allocation8 + $0x2f0] sm:$0xff]
    %v864 = vld [vmem:[#allocation8 + $0x2f8] sm:$0xff]
    %v865 = vld [vmem:[#allocation8 + $0x300] sm:$0xff]
    %v866 = vld [vmem:[#allocation8 + $0x308] sm:$0xff]
    %v867 = vld [vmem:[#allocation8 + $0x310] sm:$0xff]
    %v868 = vld [vmem:[#allocation8 + $0x318] sm:$0xff]
    %v869 = vld [vmem:[#allocation8 + $0x320] sm:$0xff]
    %v870 = vld [vmem:[#allocation8 + $0x328] sm:$0xff]
    %v871 = vld [vmem:[#allocation8 + $0x330] sm:$0xff]
    %v872 = vld [vmem:[#allocation8 + $0x338] sm:$0xff]
    %v873 = vld [vmem:[#allocation8 + $0x340] sm:$0xff]
    %v874 = vld [vmem:[#allocation8 + $0x348] sm:$0xff]
    %v875 = vld [vmem:[#allocation8 + $0x350] sm:$0xff]
    %v876 = vld [vmem:[#allocation8 + $0x358] sm:$0xff]
    %v877 = vld [vmem:[#allocation8 + $0x360] sm:$0xff]
    %v878 = vld [vmem:[#allocation8 + $0x368] sm:$0xff]
    %v879 = vld [vmem:[#allocation8 + $0x370] sm:$0xff]
    %v880 = vld [vmem:[#allocation8 + $0x378] sm:$0xff]
    %v881 = vld [vmem:[#allocation8 + $0x380] sm:$0xff]
    %v882 = vld [vmem:[#allocation8 + $0x388] sm:$0xff]
    %v883 = vld [vmem:[#allocation8 + $0x390] sm:$0xff]
    %v884 = vld [vmem:[#allocation8 + $0x398] sm:$0xff]
    %v885 = vld [vmem:[#allocation8 + $0x3a0] sm:$0xff]
    %v886 = vld [vmem:[#allocation8 + $0x3a8] sm:$0xff]
    %v887 = vld [vmem:[#allocation8 + $0x3b0] sm:$0xff]
    %v888 = vld [vmem:[#allocation8 + $0x3b8] sm:$0xff]
    %v889 = vld [vmem:[#allocation8 + $0x3c0] sm:$0xff]
    %v890 = vld [vmem:[#allocation8 + $0x3c8] sm:$0xff]
    %v891 = vld [vmem:[#allocation8 + $0x3d0] sm:$0xff]
    %v892 = vld [vmem:[#allocation8 + $0x3d8] sm:$0xff]
    %v893 = vld [vmem:[#allocation8 + $0x3e0] sm:$0xff]
    %v894 = vld [vmem:[#allocation8 + $0x3e8] sm:$0xff]
    %v895 = vld [vmem:[#allocation8 + $0x3f0] sm:$0xff]
    %v896 = vld [vmem:[#allocation8 + $0x3f8] sm:$0xff]
    %v897 = vld [vmem:[%s5] sm:$0x3]
    %v899 = vlaneseq
    %v900 = vshrl.u32 %v899, 7
    %v901 = vsub.s32 0, %v900
    %v902 = vrot.slane %v897, %v901
    %v903 = vlaneseq
    %v904 = vshrl.u32 %v903, 7
    %v905 = vsub.s32 1, %v904
    %v906 = vrot.slane %v897, %v905
    %v1037 = vunpack.c.l.b16 %v769
    %v1038 = vunpack.c.h.b16 %v769
    %v1039 = vunpack.c.l.b16 %v770
    %v1040 = vunpack.c.h.b16 %v770
    %v1041 = vunpack.c.l.b16 %v771
    %v1042 = vunpack.c.h.b16 %v771
    %v1043 = vunpack.c.l.b16 %v772
    %v1044 = vunpack.c.h.b16 %v772
    %v1045 = vunpack.c.l.b16 %v773
    %v1046 = vunpack.c.h.b16 %v773
    %v1047 = vunpack.c.l.b16 %v774
    %v1048 = vunpack.c.h.b16 %v774
    %v1049 = vunpack.c.l.b16 %v775
    %v1050 = vunpack.c.h.b16 %v775
    %v1051 = vunpack.c.l.b16 %v776
    %v1052 = vunpack.c.h.b16 %v776
    %v1053 = vunpack.c.l.b16 %v777
    %v1054 = vunpack.c.h.b16 %v777
    %v1055 = vunpack.c.l.b16 %v778
    %v1056 = vunpack.c.h.b16 %v778
    %v1057 = vunpack.c.l.b16 %v779
    %v1058 = vunpack.c.h.b16 %v779
    %v1059 = vunpack.c.l.b16 %v780
    %v1060 = vunpack.c.h.b16 %v780
    %v1061 = vunpack.c.l.b16 %v781
    %v1062 = vunpack.c.h.b16 %v781
    %v1063 = vunpack.c.l.b16 %v782
    %v1064 = vunpack.c.h.b16 %v782
    %v1065 = vunpack.c.l.b16 %v783
    %v1066 = vunpack.c.h.b16 %v783
    %v1067 = vunpack.c.l.b16 %v784
    %v1068 = vunpack.c.h.b16 %v784
    %v1069 = vunpack.c.l.b16 %v785
    %v1070 = vunpack.c.h.b16 %v785
    %v1071 = vunpack.c.l.b16 %v786
    %v1072 = vunpack.c.h.b16 %v786
    %v1073 = vunpack.c.l.b16 %v787
    %v1074 = vunpack.c.h.b16 %v787
    %v1075 = vunpack.c.l.b16 %v788
    %v1076 = vunpack.c.h.b16 %v788
    %v1077 = vunpack.c.l.b16 %v789
    %v1078 = vunpack.c.h.b16 %v789
    %v1079 = vunpack.c.l.b16 %v790
    %v1080 = vunpack.c.h.b16 %v790
    %v1081 = vunpack.c.l.b16 %v791
    %v1082 = vunpack.c.h.b16 %v791
    %v1083 = vunpack.c.l.b16 %v792
    %v1084 = vunpack.c.h.b16 %v792
    %v1085 = vunpack.c.l.b16 %v793
    %v1086 = vunpack.c.h.b16 %v793
    %v1087 = vunpack.c.l.b16 %v794
    %v1088 = vunpack.c.h.b16 %v794
    %v1089 = vunpack.c.l.b16 %v795
    %v1090 = vunpack.c.h.b16 %v795
    %v1091 = vunpack.c.l.b16 %v796
    %v1092 = vunpack.c.h.b16 %v796
    %v1093 = vunpack.c.l.b16 %v797
    %v1094 = vunpack.c.h.b16 %v797
    %v1095 = vunpack.c.l.b16 %v798
    %v1096 = vunpack.c.h.b16 %v798
    %v1097 = vunpack.c.l.b16 %v799
    %v1098 = vunpack.c.h.b16 %v799
    %v1099 = vunpack.c.l.b16 %v800
    %v1100 = vunpack.c.h.b16 %v800
    %v1101 = vunpack.c.l.b16 %v801
    %v1102 = vunpack.c.h.b16 %v801
    %v1103 = vunpack.c.l.b16 %v802
    %v1104 = vunpack.c.h.b16 %v802
    %v1105 = vunpack.c.l.b16 %v803
    %v1106 = vunpack.c.h.b16 %v803
    %v1107 = vunpack.c.l.b16 %v804
    %v1108 = vunpack.c.h.b16 %v804
    %v1109 = vunpack.c.l.b16 %v805
    %v1110 = vunpack.c.h.b16 %v805
    %v1111 = vunpack.c.l.b16 %v806
    %v1112 = vunpack.c.h.b16 %v806
    %v1113 = vunpack.c.l.b16 %v807
    %v1114 = vunpack.c.h.b16 %v807
    %v1115 = vunpack.c.l.b16 %v808
    %v1116 = vunpack.c.h.b16 %v808
    %v1117 = vunpack.c.l.b16 %v809
    %v1118 = vunpack.c.h.b16 %v809
    %v1119 = vunpack.c.l.b16 %v810
    %v1120 = vunpack.c.h.b16 %v810
    %v1121 = vunpack.c.l.b16 %v811
    %v1122 = vunpack.c.h.b16 %v811
    %v1123 = vunpack.c.l.b16 %v812
    %v1124 = vunpack.c.h.b16 %v812
    %v1125 = vunpack.c.l.b16 %v813
    %v1126 = vunpack.c.h.b16 %v813
    %v1127 = vunpack.c.l.b16 %v814
    %v1128 = vunpack.c.h.b16 %v814
    %v1129 = vunpack.c.l.b16 %v815
    %v1130 = vunpack.c.h.b16 %v815
    %v1131 = vunpack.c.l.b16 %v816
    %v1132 = vunpack.c.h.b16 %v816
    %v1133 = vunpack.c.l.b16 %v817
    %v1134 = vunpack.c.h.b16 %v817
    %v1135 = vunpack.c.l.b16 %v818
    %v1136 = vunpack.c.h.b16 %v818
    %v1137 = vunpack.c.l.b16 %v819
    %v1138 = vunpack.c.h.b16 %v819
    %v1139 = vunpack.c.l.b16 %v820
    %v1140 = vunpack.c.h.b16 %v820
    %v1141 = vunpack.c.l.b16 %v821
    %v1142 = vunpack.c.h.b16 %v821
    %v1143 = vunpack.c.l.b16 %v822
    %v1144 = vunpack.c.h.b16 %v822
    %v1145 = vunpack.c.l.b16 %v823
    %v1146 = vunpack.c.h.b16 %v823
    %v1147 = vunpack.c.l.b16 %v824
    %v1148 = vunpack.c.h.b16 %v824
    %v1149 = vunpack.c.l.b16 %v825
    %v1150 = vunpack.c.h.b16 %v825
    %v1151 = vunpack.c.l.b16 %v826
    %v1152 = vunpack.c.h.b16 %v826
    %v1153 = vunpack.c.l.b16 %v827
    %v1154 = vunpack.c.h.b16 %v827
    %v1155 = vunpack.c.l.b16 %v828
    %v1156 = vunpack.c.h.b16 %v828
    %v1157 = vunpack.c.l.b16 %v829
    %v1158 = vunpack.c.h.b16 %v829
    %v1159 = vunpack.c.l.b16 %v830
    %v1160 = vunpack.c.h.b16 %v830
    %v1161 = vunpack.c.l.b16 %v831
    %v1162 = vunpack.c.h.b16 %v831
    %v1163 = vunpack.c.l.b16 %v832
    %v1164 = vunpack.c.h.b16 %v832
    %v1165 = vunpack.c.l.b16 %v833
    %v1166 = vunpack.c.h.b16 %v833
    %v1167 = vunpack.c.l.b16 %v834
    %v1168 = vunpack.c.h.b16 %v834
    %v1169 = vunpack.c.l.b16 %v835
    %v1170 = vunpack.c.h.b16 %v835
    %v1171 = vunpack.c.l.b16 %v836
    %v1172 = vunpack.c.h.b16 %v836
    %v1173 = vunpack.c.l.b16 %v837
    %v1174 = vunpack.c.h.b16 %v837
    %v1175 = vunpack.c.l.b16 %v838
    %v1176 = vunpack.c.h.b16 %v838
    %v1177 = vunpack.c.l.b16 %v839
    %v1178 = vunpack.c.h.b16 %v839
    %v1179 = vunpack.c.l.b16 %v840
    %v1180 = vunpack.c.h.b16 %v840
    %v1181 = vunpack.c.l.b16 %v841
    %v1182 = vunpack.c.h.b16 %v841
    %v1183 = vunpack.c.l.b16 %v842
    %v1184 = vunpack.c.h.b16 %v842
    %v1185 = vunpack.c.l.b16 %v843
    %v1186 = vunpack.c.h.b16 %v843
    %v1187 = vunpack.c.l.b16 %v844
    %v1188 = vunpack.c.h.b16 %v844
    %v1189 = vunpack.c.l.b16 %v845
    %v1190 = vunpack.c.h.b16 %v845
    %v1191 = vunpack.c.l.b16 %v846
    %v1192 = vunpack.c.h.b16 %v846
    %v1193 = vunpack.c.l.b16 %v847
    %v1194 = vunpack.c.h.b16 %v847
    %v1195 = vunpack.c.l.b16 %v848
    %v1196 = vunpack.c.h.b16 %v848
    %v1197 = vunpack.c.l.b16 %v849
    %v1198 = vunpack.c.h.b16 %v849
    %v1199 = vunpack.c.l.b16 %v850
    %v1200 = vunpack.c.h.b16 %v850
    %v1201 = vunpack.c.l.b16 %v851
    %v1202 = vunpack.c.h.b16 %v851
    %v1203 = vunpack.c.l.b16 %v852
    %v1204 = vunpack.c.h.b16 %v852
    %v1205 = vunpack.c.l.b16 %v853
    %v1206 = vunpack.c.h.b16 %v853
    %v1207 = vunpack.c.l.b16 %v854
    %v1208 = vunpack.c.h.b16 %v854
    %v1209 = vunpack.c.l.b16 %v855
    %v1210 = vunpack.c.h.b16 %v855
    %v1211 = vunpack.c.l.b16 %v856
    %v1212 = vunpack.c.h.b16 %v856
    %v1213 = vunpack.c.l.b16 %v857
    %v1214 = vunpack.c.h.b16 %v857
    %v1215 = vunpack.c.l.b16 %v858
    %v1216 = vunpack.c.h.b16 %v858
    %v1217 = vunpack.c.l.b16 %v859
    %v1218 = vunpack.c.h.b16 %v859
    %v1219 = vunpack.c.l.b16 %v860
    %v1220 = vunpack.c.h.b16 %v860
    %v1221 = vunpack.c.l.b16 %v861
    %v1222 = vunpack.c.h.b16 %v861
    %v1223 = vunpack.c.l.b16 %v862
    %v1224 = vunpack.c.h.b16 %v862
    %v1225 = vunpack.c.l.b16 %v863
    %v1226 = vunpack.c.h.b16 %v863
    %v1227 = vunpack.c.l.b16 %v864
    %v1228 = vunpack.c.h.b16 %v864
    %v1229 = vunpack.c.l.b16 %v865
    %v1230 = vunpack.c.h.b16 %v865
    %v1231 = vunpack.c.l.b16 %v866
    %v1232 = vunpack.c.h.b16 %v866
    %v1233 = vunpack.c.l.b16 %v867
    %v1234 = vunpack.c.h.b16 %v867
    %v1235 = vunpack.c.l.b16 %v868
    %v1236 = vunpack.c.h.b16 %v868
    %v1237 = vunpack.c.l.b16 %v869
    %v1238 = vunpack.c.h.b16 %v869
    %v1239 = vunpack.c.l.b16 %v870
    %v1240 = vunpack.c.h.b16 %v870
    %v1241 = vunpack.c.l.b16 %v871
    %v1242 = vunpack.c.h.b16 %v871
    %v1243 = vunpack.c.l.b16 %v872
    %v1244 = vunpack.c.h.b16 %v872
    %v1245 = vunpack.c.l.b16 %v873
    %v1246 = vunpack.c.h.b16 %v873
    %v1247 = vunpack.c.l.b16 %v874
    %v1248 = vunpack.c.h.b16 %v874
    %v1249 = vunpack.c.l.b16 %v875
    %v1250 = vunpack.c.h.b16 %v875
    %v1251 = vunpack.c.l.b16 %v876
    %v1252 = vunpack.c.h.b16 %v876
    %v1253 = vunpack.c.l.b16 %v877
    %v1254 = vunpack.c.h.b16 %v877
    %v1255 = vunpack.c.l.b16 %v878
    %v1256 = vunpack.c.h.b16 %v878
    %v1257 = vunpack.c.l.b16 %v879
    %v1258 = vunpack.c.h.b16 %v879
    %v1259 = vunpack.c.l.b16 %v880
    %v1260 = vunpack.c.h.b16 %v880
    %v1261 = vunpack.c.l.b16 %v881
    %v1262 = vunpack.c.h.b16 %v881
    %v1263 = vunpack.c.l.b16 %v882
    %v1264 = vunpack.c.h.b16 %v882
    %v1265 = vunpack.c.l.b16 %v883
    %v1266 = vunpack.c.h.b16 %v883
    %v1267 = vunpack.c.l.b16 %v884
    %v1268 = vunpack.c.h.b16 %v884
    %v1269 = vunpack.c.l.b16 %v885
    %v1270 = vunpack.c.h.b16 %v885
    %v1271 = vunpack.c.l.b16 %v886
    %v1272 = vunpack.c.h.b16 %v886
    %v1273 = vunpack.c.l.b16 %v887
    %v1274 = vunpack.c.h.b16 %v887
    %v1275 = vunpack.c.l.b16 %v888
    %v1276 = vunpack.c.h.b16 %v888
    %v1277 = vunpack.c.l.b16 %v889
    %v1278 = vunpack.c.h.b16 %v889
    %v1279 = vunpack.c.l.b16 %v890
    %v1280 = vunpack.c.h.b16 %v890
    %v1281 = vunpack.c.l.b16 %v891
    %v1282 = vunpack.c.h.b16 %v891
    %v1283 = vunpack.c.l.b16 %v892
    %v1284 = vunpack.c.h.b16 %v892
    %v1285 = vunpack.c.l.b16 %v893
    %v1286 = vunpack.c.h.b16 %v893
    %v1287 = vunpack.c.l.b16 %v894
    %v1288 = vunpack.c.h.b16 %v894
    %v1289 = vunpack.c.l.b16 %v895
    %v1290 = vunpack.c.h.b16 %v895
    %v1291 = vunpack.c.l.b16 %v896
    %v1292 = vunpack.c.h.b16 %v896
    %v1293 = vpack.c.b16 %v1039, %v1037
    %v1294 = vpack.c.b16 %v1040, %v1038
    %v1295 = vpack.c.b16 %v1043, %v1041
    %v1296 = vpack.c.b16 %v1044, %v1042
    %v1297 = vpack.c.b16 %v1047, %v1045
    %v1298 = vpack.c.b16 %v1048, %v1046
    %v1299 = vpack.c.b16 %v1051, %v1049
    %v1300 = vpack.c.b16 %v1052, %v1050
    %v1301 = vpack.c.b16 %v1055, %v1053
    %v1302 = vpack.c.b16 %v1056, %v1054
    %v1303 = vpack.c.b16 %v1059, %v1057
    %v1304 = vpack.c.b16 %v1060, %v1058
    %v1305 = vpack.c.b16 %v1063, %v1061
    %v1306 = vpack.c.b16 %v1064, %v1062
    %v1307 = vpack.c.b16 %v1067, %v1065
    %v1308 = vpack.c.b16 %v1068, %v1066
    %v1309 = vpack.c.b16 %v1071, %v1069
    %v1310 = vpack.c.b16 %v1072, %v1070
    %v1311 = vpack.c.b16 %v1075, %v1073
    %v1312 = vpack.c.b16 %v1076, %v1074
    %v1313 = vpack.c.b16 %v1079, %v1077
    %v1314 = vpack.c.b16 %v1080, %v1078
    %v1315 = vpack.c.b16 %v1083, %v1081
    %v1316 = vpack.c.b16 %v1084, %v1082
    %v1317 = vpack.c.b16 %v1087, %v1085
    %v1318 = vpack.c.b16 %v1088, %v1086
    %v1319 = vpack.c.b16 %v1091, %v1089
    %v1320 = vpack.c.b16 %v1092, %v1090
    %v1321 = vpack.c.b16 %v1095, %v1093
    %v1322 = vpack.c.b16 %v1096, %v1094
    %v1323 = vpack.c.b16 %v1099, %v1097
    %v1324 = vpack.c.b16 %v1100, %v1098
    %v1325 = vpack.c.b16 %v1103, %v1101
    %v1326 = vpack.c.b16 %v1104, %v1102
    %v1327 = vpack.c.b16 %v1107, %v1105
    %v1328 = vpack.c.b16 %v1108, %v1106
    %v1329 = vpack.c.b16 %v1111, %v1109
    %v1330 = vpack.c.b16 %v1112, %v1110
    %v1331 = vpack.c.b16 %v1115, %v1113
    %v1332 = vpack.c.b16 %v1116, %v1114
    %v1333 = vpack.c.b16 %v1119, %v1117
    %v1334 = vpack.c.b16 %v1120, %v1118
    %v1335 = vpack.c.b16 %v1123, %v1121
    %v1336 = vpack.c.b16 %v1124, %v1122
    %v1337 = vpack.c.b16 %v1127, %v1125
    %v1338 = vpack.c.b16 %v1128, %v1126
    %v1339 = vpack.c.b16 %v1131, %v1129
    %v1340 = vpack.c.b16 %v1132, %v1130
    %v1341 = vpack.c.b16 %v1135, %v1133
    %v1342 = vpack.c.b16 %v1136, %v1134
    %v1343 = vpack.c.b16 %v1139, %v1137
    %v1344 = vpack.c.b16 %v1140, %v1138
    %v1345 = vpack.c.b16 %v1143, %v1141
    %v1346 = vpack.c.b16 %v1144, %v1142
    %v1347 = vpack.c.b16 %v1147, %v1145
    %v1348 = vpack.c.b16 %v1148, %v1146
    %v1349 = vpack.c.b16 %v1151, %v1149
    %v1350 = vpack.c.b16 %v1152, %v1150
    %v1351 = vpack.c.b16 %v1155, %v1153
    %v1352 = vpack.c.b16 %v1156, %v1154
    %v1353 = vpack.c.b16 %v1159, %v1157
    %v1354 = vpack.c.b16 %v1160, %v1158
    %v1355 = vpack.c.b16 %v1163, %v1161
    %v1356 = vpack.c.b16 %v1164, %v1162
    %v1357 = vpack.c.b16 %v1167, %v1165
    %v1358 = vpack.c.b16 %v1168, %v1166
    %v1359 = vpack.c.b16 %v1171, %v1169
    %v1360 = vpack.c.b16 %v1172, %v1170
    %v1361 = vpack.c.b16 %v1175, %v1173
    %v1362 = vpack.c.b16 %v1176, %v1174
    %v1363 = vpack.c.b16 %v1179, %v1177
    %v1364 = vpack.c.b16 %v1180, %v1178
    %v1365 = vpack.c.b16 %v1183, %v1181
    %v1366 = vpack.c.b16 %v1184, %v1182
    %v1367 = vpack.c.b16 %v1187, %v1185
    %v1368 = vpack.c.b16 %v1188, %v1186
    %v1369 = vpack.c.b16 %v1191, %v1189
    %v1370 = vpack.c.b16 %v1192, %v1190
    %v1371 = vpack.c.b16 %v1195, %v1193
    %v1372 = vpack.c.b16 %v1196, %v1194
    %v1373 = vpack.c.b16 %v1199, %v1197
    %v1374 = vpack.c.b16 %v1200, %v1198
    %v1375 = vpack.c.b16 %v1203, %v1201
    %v1376 = vpack.c.b16 %v1204, %v1202
    %v1377 = vpack.c.b16 %v1207, %v1205
    %v1378 = vpack.c.b16 %v1208, %v1206
    %v1379 = vpack.c.b16 %v1211, %v1209
    %v1380 = vpack.c.b16 %v1212, %v1210
    %v1381 = vpack.c.b16 %v1215, %v1213
    %v1382 = vpack.c.b16 %v1216, %v1214
    %v1383 = vpack.c.b16 %v1219, %v1217
    %v1384 = vpack.c.b16 %v1220, %v1218
    %v1385 = vpack.c.b16 %v1223, %v1221
    %v1386 = vpack.c.b16 %v1224, %v1222
    %v1387 = vpack.c.b16 %v1227, %v1225
    %v1388 = vpack.c.b16 %v1228, %v1226
    %v1389 = vpack.c.b16 %v1231, %v1229
    %v1390 = vpack.c.b16 %v1232, %v1230
    %v1391 = vpack.c.b16 %v1235, %v1233
    %v1392 = vpack.c.b16 %v1236, %v1234
    %v1393 = vpack.c.b16 %v1239, %v1237
    %v1394 = vpack.c.b16 %v1240, %v1238
    %v1395 = vpack.c.b16 %v1243, %v1241
    %v1396 = vpack.c.b16 %v1244, %v1242
    %v1397 = vpack.c.b16 %v1247, %v1245
    %v1398 = vpack.c.b16 %v1248, %v1246
    %v1399 = vpack.c.b16 %v1251, %v1249
    %v1400 = vpack.c.b16 %v1252, %v1250
    %v1401 = vpack.c.b16 %v1255, %v1253
    %v1402 = vpack.c.b16 %v1256, %v1254
    %v1403 = vpack.c.b16 %v1259, %v1257
    %v1404 = vpack.c.b16 %v1260, %v1258
    %v1405 = vpack.c.b16 %v1263, %v1261
    %v1406 = vpack.c.b16 %v1264, %v1262
    %v1407 = vpack.c.b16 %v1267, %v1265
    %v1408 = vpack.c.b16 %v1268, %v1266
    %v1409 = vpack.c.b16 %v1271, %v1269
    %v1410 = vpack.c.b16 %v1272, %v1270
    %v1411 = vpack.c.b16 %v1275, %v1273
    %v1412 = vpack.c.b16 %v1276, %v1274
    %v1413 = vpack.c.b16 %v1279, %v1277
    %v1414 = vpack.c.b16 %v1280, %v1278
    %v1415 = vpack.c.b16 %v1283, %v1281
    %v1416 = vpack.c.b16 %v1284, %v1282
    %v1417 = vpack.c.b16 %v1287, %v1285
    %v1418 = vpack.c.b16 %v1288, %v1286
    %v1419 = vpack.c.b16 %v1291, %v1289
    %v1420 = vpack.c.b16 %v1292, %v1290
    %1549 = vmatprep.subr.bf16.mxu0 %v1294
    %1550 = vmatpush1.bf16.msra.mxu0 %v1293
    %1551 = vmatprep.subr.bf16.mxu0 %v1296
    %1552 = vmatpush1.bf16.msra.mxu0 %v1295
    %1553 = vmatprep.subr.bf16.mxu0 %v1298
    %1554 = vmatpush1.bf16.msra.mxu0 %v1297
    %1555 = vmatprep.subr.bf16.mxu0 %v1300
    %1556 = vmatpush1.bf16.msra.mxu0 %v1299
    %1557 = vmatprep.subr.bf16.mxu0 %v1302
    %1558 = vmatpush1.bf16.msra.mxu0 %v1301
    %1559 = vmatprep.subr.bf16.mxu0 %v1304
    %1560 = vmatpush1.bf16.msra.mxu0 %v1303
    %1561 = vmatprep.subr.bf16.mxu0 %v1306
    %1562 = vmatpush1.bf16.msra.mxu0 %v1305
    %1563 = vmatprep.subr.bf16.mxu0 %v1308
    %1564 = vmatpush1.bf16.msra.mxu0 %v1307
    %1565 = vmatprep.subr.bf16.mxu0 %v1310
    %1566 = vmatpush1.bf16.msra.mxu0 %v1309
    %1567 = vmatprep.subr.bf16.mxu0 %v1312
    %1568 = vmatpush1.bf16.msra.mxu0 %v1311
    %1569 = vmatprep.subr.bf16.mxu0 %v1314
    %1570 = vmatpush1.bf16.msra.mxu0 %v1313
    %1571 = vmatprep.subr.bf16.mxu0 %v1316
    %1572 = vmatpush1.bf16.msra.mxu0 %v1315
    %1573 = vmatprep.subr.bf16.mxu0 %v1318
    %1574 = vmatpush1.bf16.msra.mxu0 %v1317
    %1575 = vmatprep.subr.bf16.mxu0 %v1320
    %1576 = vmatpush1.bf16.msra.mxu0 %v1319
    %1577 = vmatprep.subr.bf16.mxu0 %v1322
    %1578 = vmatpush1.bf16.msra.mxu0 %v1321
    %1579 = vmatprep.subr.bf16.mxu0 %v1324
    %1580 = vmatpush1.bf16.msra.mxu0 %v1323
    %1581 = vmatprep.mubr.bf16.mxu0 %v762
    %1582 = vmatmul.mubr.bf16.gmra.mrb[0].mxu0 %v761
    %v1583 = vpop.f32.mrb[0].mxu0
    %v1584 = vadd.f32 %v902, %v1583
    %v1585 = vpop.f32.mrb[0].mxu0
    %v1586 = vadd.f32 %v906, %v1585
    %v1587 = vpop.f32.mrb[0].mxu0
    %v1588 = vadd.f32 %v902, %v1587
    %v1589 = vpop.f32.mrb[0].mxu0
    %v1590 = vadd.f32 %v906, %v1589
    %1591 = vdwg.mxu0
    %1592 = vmatprep.subr.bf16.mxu0 %v1326
    %1593 = vmatpush1.bf16.msra.mxu0 %v1325
    %1594 = vmatprep.subr.bf16.mxu0 %v1328
    %1595 = vmatpush1.bf16.msra.mxu0 %v1327
    %1596 = vmatprep.subr.bf16.mxu0 %v1330
    %1597 = vmatpush1.bf16.msra.mxu0 %v1329
    %1598 = vmatprep.subr.bf16.mxu0 %v1332
    %1599 = vmatpush1.bf16.msra.mxu0 %v1331
    %1600 = vmatprep.subr.bf16.mxu0 %v1334
    %1601 = vmatpush1.bf16.msra.mxu0 %v1333
    %1602 = vmatprep.subr.bf16.mxu0 %v1336
    %1603 = vmatpush1.bf16.msra.mxu0 %v1335
    %1604 = vmatprep.subr.bf16.mxu0 %v1338
    %1605 = vmatpush1.bf16.msra.mxu0 %v1337
    %1606 = vmatprep.subr.bf16.mxu0 %v1340
    %1607 = vmatpush1.bf16.msra.mxu0 %v1339
    %1608 = vmatprep.subr.bf16.mxu0 %v1342
    %1609 = vmatpush1.bf16.msra.mxu0 %v1341
    %1610 = vmatprep.subr.bf16.mxu0 %v1344
    %1611 = vmatpush1.bf16.msra.mxu0 %v1343
    %1612 = vmatprep.subr.bf16.mxu0 %v1346
    %1613 = vmatpush1.bf16.msra.mxu0 %v1345
    %1614 = vmatprep.subr.bf16.mxu0 %v1348
    %1615 = vmatpush1.bf16.msra.mxu0 %v1347
    %1616 = vmatprep.subr.bf16.mxu0 %v1350
    %1617 = vmatpush1.bf16.msra.mxu0 %v1349
    %1618 = vmatprep.subr.bf16.mxu0 %v1352
    %1619 = vmatpush1.bf16.msra.mxu0 %v1351
    %1620 = vmatprep.subr.bf16.mxu0 %v1354
    %1621 = vmatpush1.bf16.msra.mxu0 %v1353
    %1622 = vmatprep.subr.bf16.mxu0 %v1356
    %1623 = vmatpush1.bf16.msra.mxu0 %v1355
    %1624 = vmatprep.mubr.bf16.mxu0 %v764
    %1625 = vmatmul.mubr.bf16.gmra.mrb[0].mxu0 %v763
    %v1626 = vpop.f32.mrb[0].mxu0
    %v1627 = vadd.f32 %v1584, %v1626
    %v1628 = vpop.f32.mrb[0].mxu0
    %v1629 = vadd.f32 %v1586, %v1628
    %v1630 = vpop.f32.mrb[0].mxu0
    %v1631 = vadd.f32 %v1588, %v1630
    %v1632 = vpop.f32.mrb[0].mxu0
    %v1633 = vadd.f32 %v1590, %v1632
    %1634 = vdwg.mxu0
    %1635 = vmatprep.subr.bf16.mxu0 %v1358
    %1636 = vmatpush1.bf16.msra.mxu0 %v1357
    %1637 = vmatprep.subr.bf16.mxu0 %v1360
    %1638 = vmatpush1.bf16.msra.mxu0 %v1359
    %1639 = vmatprep.subr.bf16.mxu0 %v1362
    %1640 = vmatpush1.bf16.msra.mxu0 %v1361
    %1641 = vmatprep.subr.bf16.mxu0 %v1364
    %1642 = vmatpush1.bf16.msra.mxu0 %v1363
    %1643 = vmatprep.subr.bf16.mxu0 %v1366
    %1644 = vmatpush1.bf16.msra.mxu0 %v1365
    %1645 = vmatprep.subr.bf16.mxu0 %v1368
    %1646 = vmatpush1.bf16.msra.mxu0 %v1367
    %1647 = vmatprep.subr.bf16.mxu0 %v1370
    %1648 = vmatpush1.bf16.msra.mxu0 %v1369
    %1649 = vmatprep.subr.bf16.mxu0 %v1372
    %1650 = vmatpush1.bf16.msra.mxu0 %v1371
    %1651 = vmatprep.subr.bf16.mxu0 %v1374
    %1652 = vmatpush1.bf16.msra.mxu0 %v1373
    %1653 = vmatprep.subr.bf16.mxu0 %v1376
    %1654 = vmatpush1.bf16.msra.mxu0 %v1375
    %1655 = vmatprep.subr.bf16.mxu0 %v1378
    %1656 = vmatpush1.bf16.msra.mxu0 %v1377
    %1657 = vmatprep.subr.bf16.mxu0 %v1380
    %1658 = vmatpush1.bf16.msra.mxu0 %v1379
    %1659 = vmatprep.subr.bf16.mxu0 %v1382
    %1660 = vmatpush1.bf16.msra.mxu0 %v1381
    %1661 = vmatprep.subr.bf16.mxu0 %v1384
    %1662 = vmatpush1.bf16.msra.mxu0 %v1383
    %1663 = vmatprep.subr.bf16.mxu0 %v1386
    %1664 = vmatpush1.bf16.msra.mxu0 %v1385
    %1665 = vmatprep.subr.bf16.mxu0 %v1388
    %1666 = vmatpush1.bf16.msra.mxu0 %v1387
    %1667 = vmatprep.mubr.bf16.mxu0 %v766
    %1668 = vmatmul.mubr.bf16.gmra.mrb[0].mxu0 %v765
    %v1669 = vpop.f32.mrb[0].mxu0
    %v1670 = vadd.f32 %v1627, %v1669
    %v1671 = vpop.f32.mrb[0].mxu0
    %v1672 = vadd.f32 %v1629, %v1671
    %v1673 = vpop.f32.mrb[0].mxu0
    %v1674 = vadd.f32 %v1631, %v1673
    %v1675 = vpop.f32.mrb[0].mxu0
    %v1676 = vadd.f32 %v1633, %v1675
    %1677 = vdwg.mxu0
    %1678 = vmatprep.subr.bf16.mxu0 %v1390
    %1679 = vmatpush1.bf16.msra.mxu0 %v1389
    %1680 = vmatprep.subr.bf16.mxu0 %v1392
    %1681 = vmatpush1.bf16.msra.mxu0 %v1391
    %1682 = vmatprep.subr.bf16.mxu0 %v1394
    %1683 = vmatpush1.bf16.msra.mxu0 %v1393
    %1684 = vmatprep.subr.bf16.mxu0 %v1396
    %1685 = vmatpush1.bf16.msra.mxu0 %v1395
    %1686 = vmatprep.subr.bf16.mxu0 %v1398
    %1687 = vmatpush1.bf16.msra.mxu0 %v1397
    %1688 = vmatprep.subr.bf16.mxu0 %v1400
    %1689 = vmatpush1.bf16.msra.mxu0 %v1399
    %1690 = vmatprep.subr.bf16.mxu0 %v1402
    %1691 = vmatpush1.bf16.msra.mxu0 %v1401
    %1692 = vmatprep.subr.bf16.mxu0 %v1404
    %1693 = vmatpush1.bf16.msra.mxu0 %v1403
    %1694 = vmatprep.subr.bf16.mxu0 %v1406
    %1695 = vmatpush1.bf16.msra.mxu0 %v1405
    %1696 = vmatprep.subr.bf16.mxu0 %v1408
    %1697 = vmatpush1.bf16.msra.mxu0 %v1407
    %1698 = vmatprep.subr.bf16.mxu0 %v1410
    %1699 = vmatpush1.bf16.msra.mxu0 %v1409
    %1700 = vmatprep.subr.bf16.mxu0 %v1412
    %1701 = vmatpush1.bf16.msra.mxu0 %v1411
    %1702 = vmatprep.subr.bf16.mxu0 %v1414
    %1703 = vmatpush1.bf16.msra.mxu0 %v1413
    %1704 = vmatprep.subr.bf16.mxu0 %v1416
    %1705 = vmatpush1.bf16.msra.mxu0 %v1415
    %1706 = vmatprep.subr.bf16.mxu0 %v1418
    %1707 = vmatpush1.bf16.msra.mxu0 %v1417
    %1708 = vmatprep.subr.bf16.mxu0 %v1420
    %1709 = vmatpush1.bf16.msra.mxu0 %v1419
    %1710 = vmatprep.mubr.bf16.mxu0 %v768
    %1711 = vmatmul.mubr.bf16.gmra.mrb[0].mxu0 %v767
    %v1712 = vpop.f32.mrb[0].mxu0
    %v1713 = vadd.f32 %v1670, %v1712
    %v1714 = vpop.f32.mrb[0].mxu0
    %v1715 = vadd.f32 %v1672, %v1714
    %v1716 = vpop.f32.mrb[0].mxu0
    %v1717 = vadd.f32 %v1674, %v1716
    %v1718 = vpop.f32.mrb[0].mxu0
    %v1719 = vadd.f32 %v1676, %v1718
    %1720 = vdwg.mxu0
    %v1721 = vmax.f32 %v1713, 0.0
    %v1722 = vmax.f32 %v1715, 0.0
    %v1723 = vmax.f32 %v1717, 0.0
    %v1724 = vmax.f32 %v1719, 0.0
    %v1725 = vpack.c.bf16 %v1723, %v1721
    %v1726 = vpack.c.bf16 %v1724, %v1722
    %v1727 = vld [vmem:[#allocation10] sm:$0xf]
    %v1728 = vld [vmem:[#allocation10 + $0x4] sm:$0xf]
    %v1729 = vld [vmem:[#allocation10 + $0x8] sm:$0xf]
    %v1730 = vld [vmem:[#allocation10 + $0xc] sm:$0xf]
    %v1731 = vld [vmem:[#allocation10 + $0x10] sm:$0xf]
    %v1732 = vld [vmem:[#allocation10 + $0x14] sm:$0xf]
    %v1733 = vld [vmem:[#allocation10 + $0x18] sm:$0xf]
    %v1734 = vld [vmem:[#allocation10 + $0x1c] sm:$0xf]
    %v1735 = vld [vmem:[#allocation10 + $0x20] sm:$0xf]
    %v1736 = vld [vmem:[#allocation10 + $0x24] sm:$0xf]
    %v1737 = vld [vmem:[#allocation10 + $0x28] sm:$0xf]
    %v1738 = vld [vmem:[#allocation10 + $0x2c] sm:$0xf]
    %v1739 = vld [vmem:[#allocation10 + $0x30] sm:$0xf]
    %v1740 = vld [vmem:[#allocation10 + $0x34] sm:$0xf]
    %v1741 = vld [vmem:[#allocation10 + $0x38] sm:$0xf]
    %v1742 = vld [vmem:[#allocation10 + $0x3c] sm:$0xf]
    %v1743 = vld [vmem:[#allocation10 + $0x40] sm:$0xf]
    %v1744 = vld [vmem:[#allocation10 + $0x44] sm:$0xf]
    %v1745 = vld [vmem:[#allocation10 + $0x48] sm:$0xf]
    %v1746 = vld [vmem:[#allocation10 + $0x4c] sm:$0xf]
    %v1747 = vld [vmem:[#allocation10 + $0x50] sm:$0xf]
    %v1748 = vld [vmem:[#allocation10 + $0x54] sm:$0xf]
    %v1749 = vld [vmem:[#allocation10 + $0x58] sm:$0xf]
    %v1750 = vld [vmem:[#allocation10 + $0x5c] sm:$0xf]
    %v1751 = vld [vmem:[#allocation10 + $0x60] sm:$0xf]
    %v1752 = vld [vmem:[#allocation10 + $0x64] sm:$0xf]
    %v1753 = vld [vmem:[#allocation10 + $0x68] sm:$0xf]
    %v1754 = vld [vmem:[#allocation10 + $0x6c] sm:$0xf]
    %v1755 = vld [vmem:[#allocation10 + $0x70] sm:$0xf]
    %v1756 = vld [vmem:[#allocation10 + $0x74] sm:$0xf]
    %v1757 = vld [vmem:[#allocation10 + $0x78] sm:$0xf]
    %v1758 = vld [vmem:[#allocation10 + $0x7c] sm:$0xf]
    %v1759 = vld [vmem:[%s7] sm:$0x1]
    %v1761 = vlaneseq
    %v1762 = vshrl.u32 %v1761, 7
    %v1763 = vsub.s32 0, %v1762
    %v1764 = vrot.slane %v1759, %v1763
    %v1798 = vunpack.c.l.b16 %v1727
    %v1799 = vunpack.c.l.b16 %v1728
    %v1800 = vunpack.c.l.b16 %v1729
    %v1801 = vunpack.c.l.b16 %v1730
    %v1802 = vunpack.c.l.b16 %v1731
    %v1803 = vunpack.c.l.b16 %v1732
    %v1804 = vunpack.c.l.b16 %v1733
    %v1805 = vunpack.c.l.b16 %v1734
    %v1806 = vunpack.c.l.b16 %v1735
    %v1807 = vunpack.c.l.b16 %v1736
    %v1808 = vunpack.c.l.b16 %v1737
    %v1809 = vunpack.c.l.b16 %v1738
    %v1810 = vunpack.c.l.b16 %v1739
    %v1811 = vunpack.c.l.b16 %v1740
    %v1812 = vunpack.c.l.b16 %v1741
    %v1813 = vunpack.c.l.b16 %v1742
    %v1814 = vunpack.c.l.b16 %v1743
    %v1815 = vunpack.c.l.b16 %v1744
    %v1816 = vunpack.c.l.b16 %v1745
    %v1817 = vunpack.c.l.b16 %v1746
    %v1818 = vunpack.c.l.b16 %v1747
    %v1819 = vunpack.c.l.b16 %v1748
    %v1820 = vunpack.c.l.b16 %v1749
    %v1821 = vunpack.c.l.b16 %v1750
    %v1822 = vunpack.c.l.b16 %v1751
    %v1823 = vunpack.c.l.b16 %v1752
    %v1824 = vunpack.c.l.b16 %v1753
    %v1825 = vunpack.c.l.b16 %v1754
    %v1826 = vunpack.c.l.b16 %v1755
    %v1827 = vunpack.c.l.b16 %v1756
    %v1828 = vunpack.c.l.b16 %v1757
    %v1829 = vunpack.c.l.b16 %v1758
    %v1830 = vpack.c.b16 %v1799, %v1798
    %v1831 = vpack.c.b16 %v1801, %v1800
    %v1832 = vpack.c.b16 %v1803, %v1802
    %v1833 = vpack.c.b16 %v1805, %v1804
    %v1834 = vpack.c.b16 %v1807, %v1806
    %v1835 = vpack.c.b16 %v1809, %v1808
    %v1836 = vpack.c.b16 %v1811, %v1810
    %v1837 = vpack.c.b16 %v1813, %v1812
    %v1838 = vpack.c.b16 %v1815, %v1814
    %v1839 = vpack.c.b16 %v1817, %v1816
    %v1840 = vpack.c.b16 %v1819, %v1818
    %v1841 = vpack.c.b16 %v1821, %v1820
    %v1842 = vpack.c.b16 %v1823, %v1822
    %v1843 = vpack.c.b16 %v1825, %v1824
    %v1844 = vpack.c.b16 %v1827, %v1826
    %v1845 = vpack.c.b16 %v1829, %v1828
    %1862 = vmatprep.subr.bf16.mxu0 0
    %1863 = vmatpush1.bf16.msra.mxu0 %v1830
    %1864 = vmatprep.subr.bf16.mxu0 0
    %1865 = vmatpush1.bf16.msra.mxu0 %v1831
    %1866 = vmatprep.subr.bf16.mxu0 0
    %1867 = vmatpush1.bf16.msra.mxu0 %v1832
    %1868 = vmatprep.subr.bf16.mxu0 0
    %1869 = vmatpush1.bf16.msra.mxu0 %v1833
    %1870 = vmatprep.subr.bf16.mxu0 0
    %1871 = vmatpush1.bf16.msra.mxu0 %v1834
    %1872 = vmatprep.subr.bf16.mxu0 0
    %1873 = vmatpush1.bf16.msra.mxu0 %v1835
    %1874 = vmatprep.subr.bf16.mxu0 0
    %1875 = vmatpush1.bf16.msra.mxu0 %v1836
    %1876 = vmatprep.subr.bf16.mxu0 0
    %1877 = vmatpush1.bf16.msra.mxu0 %v1837
    %1878 = vmatprep.subr.bf16.mxu0 0
    %1879 = vmatpush1.bf16.msra.mxu0 %v1838
    %1880 = vmatprep.subr.bf16.mxu0 0
    %1881 = vmatpush1.bf16.msra.mxu0 %v1839
    %1882 = vmatprep.subr.bf16.mxu0 0
    %1883 = vmatpush1.bf16.msra.mxu0 %v1840
    %1884 = vmatprep.subr.bf16.mxu0 0
    %1885 = vmatpush1.bf16.msra.mxu0 %v1841
    %1886 = vmatprep.subr.bf16.mxu0 0
    %1887 = vmatpush1.bf16.msra.mxu0 %v1842
    %1888 = vmatprep.subr.bf16.mxu0 0
    %1889 = vmatpush1.bf16.msra.mxu0 %v1843
    %1890 = vmatprep.subr.bf16.mxu0 0
    %1891 = vmatpush1.bf16.msra.mxu0 %v1844
    %1892 = vmatprep.subr.bf16.mxu0 0
    %1893 = vmatpush1.bf16.msra.mxu0 %v1845
    %1894 = vmatprep.mubr.bf16.mxu0 %v1726
    %1895 = vmatmul.mubr.bf16.gmra.mrb[0].mxu0 %v1725
    %v1896 = vpop.f32.mrb[0].mxu0
    %v1897 = vadd.f32 %v1764, %v1896
    %v1898 = vpop.f32.mrb[0].mxu0
    %v1899 = vpop.f32.mrb[0].mxu0
    %v1900 = vadd.f32 %v1764, %v1899
    %v1901 = vpop.f32.mrb[0].mxu0
    %1902 = vdwg.mxu0
    %v1903 = vpack.c.bf16 %v1900, %v1897
    %v1905 = vunpack.c.l.b16 %v1903
    %v1906 = vunpack.c.h.b16 %v1903
    %v1907 = vpack.c.b16 %v1905, %v1905
    %v1908 = vpack.c.b16 %v1906, %v1906
    %1911 = vst [vmem:[#allocation11] sm:$0xf] %v1907
    %1912 = vst [vmem:[#allocation11 + $0x4] sm:$0xf] %v1908
    // Predicated region
    $region54: #{tpu_custom_call.1} parent=1 // pred_check
      _
    $region55: #{tpu_custom_call.1} parent=1 // pred_check_branch
      %1914 = sbr.rel (0) target = $region57
    $region56: #{tpu_custom_call.1} parent=1 // pred_region
      %s1916 = ssub.s32 128, 128
      %1917 = vsyncadd [#allocation4], %s1916
      %s1918 = sshll.u32 [#allocation11], 4
      %s1919 = int_to_ptr.vmem [resolvable:$true] %s1918
      %1924 = dma.vmem_to_hbm [thread:$0]  %s1919, 128, %s8, [#allocation4], 64, 64, 4
    $region57: #{tpu_custom_call.1} parent=1 // pred_fallthru
      _
    // Predicated region
    $region58: #{tpu_custom_call.1} parent=1 // pred_check
      _
    $region59: #{tpu_custom_call.1} parent=1 // pred_check_branch
      %1926 = sbr.rel (0) target = $region61
    $region60: #{tpu_custom_call.1} parent=1 // pred_region
      %1927 = dma.done [#allocation4], 128
    $region61: #{tpu_custom_call.1} parent=1 // pred_fallthru
      _
    %1928 = vsyncpa [#allocation3], 1
    %1929 = vsyncpa [#allocation6], 1
    %1930 = vsyncpa [#allocation9], 1
    %1931 = vsyncpa [#allocation4], 1

</llo_original>
